<compile_context>
chip_gen: v7x
topology: tpu7x:2x2x1
jax: 0.10.0
libtpu: 0.0.40
codegen_flags: <defaults>
</compile_context>

<pallas_src>
import functools
import math

import jax
import jax.numpy as jnp
from jax import lax
from jax.experimental import pallas as pl
from jax.experimental.pallas import tpu as pltpu  # noqa: F401  (TPU backend)


def _round_up(x, m):
    return ((x + m - 1) // m) * m


# ------------------------------------------------------------------ in-kernel helpers
def _linear_t(x, w, b):
    # x: (N, Din), w: (Dout, Din), b: (1, Dout)  ->  (N, Dout)
    y = lax.dot_general(x, w, (((1,), (1,)), ((), ())),
                        preferred_element_type=jnp.float32)
    return y + b


def _softmax_last(x):
    m = jnp.max(x, axis=-1, keepdims=True)
    e = jnp.exp(x - m)
    s = jnp.sum(e, axis=-1, keepdims=True)
    return e / s                      # exact reciprocal (kernel is overhead-bound)


# ------------------------------------------------------------------ fused kernel
def _attention_block_kernel(x_ref, w_ref, b_ref, o_ref, *,
                            batch, seq_kv, seq_q, n_kv, n_q,
                            fc, e, num_heads, o_pad):
    """x_ref: (2*n_kv + n_q, cpad) packed [keys | values | queries] rows.
       w_ref: (3*(2*fc+e) + 3*e + o_pad, cpad) packed weights.
       b_ref: (11, bpad) packed biases.
       o_ref: (n_q, o_pad) lane-dense output."""
    BB = b_ref[...]                                   # tiny: load once, value-slice
    dh = e // num_heads
    t_stride = 2 * fc + e

    def tower(x, t, final_softmax):
        r = t * t_stride
        w1 = w_ref[r:r + fc, :]                       # (fc, cpad) - input is 0-padded
        w2 = w_ref[r + fc:r + 2 * fc, :][:, :fc]      # (fc, fc)
        w3 = w_ref[r + 2 * fc:r + 2 * fc + e, :][:, :fc]  # (e, fc)
        b1 = BB[3 * t:3 * t + 1, :fc]
        b2 = BB[3 * t + 1:3 * t + 2, :fc]
        b3 = BB[3 * t + 2:3 * t + 3, :e]
        h = jnp.maximum(_linear_t(x, w1, b1), 0.0)
        h = jnp.maximum(_linear_t(h, w2, b2), 0.0)
        h = _linear_t(h, w3, b3)
        return _softmax_last(h) if final_softmax else jnp.maximum(h, 0.0)

    # ---- three MLP towers on batch-flattened rows (one matmul chain each) ----
    key = tower(x_ref[0:n_kv, :], 0, False)                       # (n_kv, e)
    val = tower(x_ref[n_kv:2 * n_kv, :], 1, False)                # (n_kv, e)
    qry = tower(x_ref[2 * n_kv:2 * n_kv + n_q, :], 2, True)       # (n_q,  e)

    # ---- attention projection weights (q-scale already folded into wq/bq) ----
    a0 = 3 * t_stride
    wq = w_ref[a0:a0 + e, :][:, :e]
    wk = w_ref[a0 + e:a0 + 2 * e, :][:, :e]
    wv = w_ref[a0 + 2 * e:a0 + 3 * e, :][:, :e]
    wo = w_ref[a0 + 3 * e:a0 + 3 * e + o_pad, :][:, :e]           # (o_pad, e)
    bq = BB[9:10, 0:e]
    bk = BB[9:10, e:2 * e]
    bv = BB[9:10, 2 * e:3 * e]
    bo = BB[10:11, :o_pad]

    # ---- hoisted in-projections: one matmul per tensor, ALL batches at once ----
    qp = _linear_t(qry, wq, bq)                                   # (n_q,  e)
    kp = _linear_t(key, wk, bk)                                   # (n_kv, e)
    vp = _linear_t(val, wv, bv)                                   # (n_kv, e)

    # ---- block-diagonal batch mask (also masks zero-padded rows/cols) ----
    rows = lax.broadcasted_iota(jnp.int32, (n_q, n_kv), 0)
    cols = lax.broadcasted_iota(jnp.int32, (n_q, n_kv), 1)
    mask = None
    for b in range(batch):
        in_q = (rows >= b * seq_q) & (rows < (b + 1) * seq_q)
        in_kv = (cols >= b * seq_kv) & (cols < (b + 1) * seq_kv)
        blk = in_q & in_kv
        mask = blk if mask is None else (mask | blk)

    # ---- per-head attention: plain 2-D MXU matmuls, no reshape/transpose ----
    ctx = []
    for h in range(num_heads):
        sl = slice(h * dh, (h + 1) * dh)
        s = lax.dot_general(qp[:, sl], kp[:, sl], (((1,), (1,)), ((), ())),
                            preferred_element_type=jnp.float32)   # (n_q, n_kv)
        p = _softmax_last(jnp.where(mask, s, -1e30))
        ctx.append(lax.dot_general(p, vp[:, sl], (((1,), (0,)), ((), ())),
                                   preferred_element_type=jnp.float32))  # (n_q, dh)
    ctx = jnp.concatenate(ctx, axis=-1)                           # (n_q, e)

    # ---- single lane-dense out-projection for all batches ----
    o_ref[...] = _linear_t(ctx, wo, bo)                           # (n_q, o_pad)


# ------------------------------------------------------------------ one-time param packing
def prepare_params(params, num_heads):
    """Pack all weights/biases into 2 slabs; fold q-scale; pad for lane density.
    Call ONCE; the per-call wrapper does no weight preprocessing."""
    kw1, kb1, kw2, kb2, kw3, kb3 = params["key_gen"]
    vw1, vb1, vw2, vb2, vw3, vb3 = params["val_gen"]
    qw1, qb1, qw2, qb2, qw3, qb3 = params["query_gen"]
    win = params["in_proj_w"]        # (3E, E)
    binp = params["in_proj_b"]       # (1, 3E)
    wo = params["out_proj_w"]        # (E, E)
    bo = params["out_proj_b"]        # (1, E)

    fc = kw1.shape[0]
    e = wo.shape[0]
    dh = e // num_heads
    scale = 1.0 / math.sqrt(dh)

    o_pad = _round_up(e, 128)                         # lane-dense output width
    cpad = max(kw1.shape[1], vw1.shape[1], qw1.shape[1], fc, e)
    bpad = max(o_pad, 3 * e)

    def padw(w):
        return jnp.pad(w, ((0, 0), (0, cpad - w.shape[1])))

    def padb(b):
        return jnp.pad(b, ((0, 0), (0, bpad - b.shape[1])))

    wq = win[:e] * scale                              # fold 1/sqrt(dh) into Wq
    wk = win[e:2 * e]
    wv = win[2 * e:]
    wo_pad = jnp.pad(wo, ((0, o_pad - e), (0, 0)))    # (o_pad, E) zero rows

    w_slab = jnp.concatenate([
        padw(kw1), padw(kw2), padw(kw3),
        padw(vw1), padw(vw2), padw(vw3),
        padw(qw1), padw(qw2), padw(qw3),
        padw(wq), padw(wk), padw(wv), padw(wo_pad)], axis=0)

    binp_scaled = jnp.concatenate([binp[:, :e] * scale, binp[:, e:]], axis=1)
    b_slab = jnp.concatenate([
        padb(kb1), padb(kb2), padb(kb3),
        padb(vb1), padb(vb2), padb(vb3),
        padb(qb1), padb(qb2), padb(qb3),
        padb(binp_scaled), padb(bo)], axis=0)         # (11, bpad)

    return {"w_slab": w_slab, "b_slab": b_slab,
            "fc": fc, "e": e, "o_pad": o_pad, "cpad": cpad,
            "num_heads": num_heads}


# ------------------------------------------------------------------ forward wrapper
def attention_block_forward(keys, values, queries, prep):
    """keys: (B,S,Kd), values: (B,S,Vd), queries: (B,L,Qd) -> (B,L,hidden)."""
    B, S, _ = keys.shape
    _, L, _ = queries.shape
    cpad, e, fc, o_pad, H = (prep["cpad"], prep["e"], prep["fc"],
                             prep["o_pad"], prep["num_heads"])

    n_kv = _round_up(B * S, 8)        # sublane-aligned flattened kv rows
    n_q = _round_up(B * L, 8)         # sublane-aligned flattened query rows

    def flat_pad(x, n_rows):
        bsz, s, d = x.shape
        xf = x.reshape(bsz * s, d)
        return jnp.pad(xf, ((0, n_rows - bsz * s), (0, cpad - d)))

    # One packed activation slab -> one input DMA (pad rows/cols are zero and
    # are excluded from attention by the in-kernel block-diagonal mask).
    x_slab = jnp.concatenate([flat_pad(keys, n_kv),
                              flat_pad(values, n_kv),
                              flat_pad(queries, n_q)], axis=0)

    kernel = functools.partial(_attention_block_kernel,
                               batch=B, seq_kv=S, seq_q=L,
                               n_kv=n_kv, n_q=n_q, fc=fc, e=e,
                               num_heads=H, o_pad=o_pad)
    out_pad = pl.pallas_call(
        kernel,
        out_shape=jax.ShapeDtypeStruct((n_q, o_pad), jnp.float32),
    )(x_slab, prep["w_slab"], prep["b_slab"])

    return out_pad[:B * L, :e].reshape(B, L, e)


# ------------------------------------------------------------------ pure-JAX reference
def _ref_linear(x, w, b):
    return jnp.einsum("...i,oi->...o", x, w) + b[0]


def _ref_tower(x, params, final_softmax):
    w1, b1, w2, b2, w3, b3 = params
    h = jnp.maximum(_ref_linear(x, w1, b1), 0.0)
    h = jnp.maximum(_ref_linear(h, w2, b2), 0.0)
    h = _ref_linear(h, w3, b3)
    return jax.nn.softmax(h, axis=-1) if final_softmax else jnp.maximum(h, 0.0)


def _ref_forward(keys, values, queries, params, num_heads):
    key = _ref_tower(keys, params["key_gen"], False)
    value = _ref_tower(values, params["val_gen"], False)
    query = _ref_tower(queries, params["query_gen"], True)
    win, binp = params["in_proj_w"], params["in_proj_b"]
    E = query.shape[-1]
    qp = jnp.einsum("...i,oi->...o", query, win[:E]) + binp[0, :E]
    kp = jnp.einsum("...i,oi->...o", key, win[E:2 * E]) + binp[0, E:2 * E]
    vp = jnp.einsum("...i,oi->...o", value, win[2 * E:]) + binp[0, 2 * E:]
    B, L, _ = qp.shape
    S = kp.shape[1]
    dh = E // num_heads
    qh = qp.reshape(B, L, num_heads, dh)
    kh = kp.reshape(B, S, num_heads, dh)
    vh = vp.reshape(B, S, num_heads, dh)
    s = jnp.einsum("blhd,bshd->bhls", qh, kh) / math.sqrt(dh)
    p = jax.nn.softmax(s, axis=-1)
    ctx = jnp.einsum("bhls,bshd->blhd", p, vh).reshape(B, L, E)
    return jnp.einsum("...i,oi->...o", ctx, params["out_proj_w"]) + params["out_proj_b"][0]


# ------------------------------------------------------------------ params
def _init_linear(key, in_dim, out_dim):
    kw, kb = jax.random.split(key)
    w = jax.random.normal(kw, (out_dim, in_dim), jnp.float32) / math.sqrt(in_dim)
    b = 0.01 * jax.random.normal(kb, (1, out_dim), jnp.float32)
    return w, b


def init_params(key, key_dim, val_dim, query_dim, hidden_dim, num_heads, attnFCdim):
    ks = jax.random.split(key, 12)

    def tower(k0, k1, k2, in_dim):
        w1, b1 = _init_linear(k0, in_dim, attnFCdim)
        w2, b2 = _init_linear(k1, attnFCdim, attnFCdim)
        w3, b3 = _init_linear(k2, attnFCdim, hidden_dim)
        return (w1, b1, w2, b2, w3, b3)

    in_proj_w = jax.random.normal(ks[9], (3 * hidden_dim, hidden_dim),
                                  jnp.float32) / math.sqrt(hidden_dim)
    in_proj_b = 0.01 * jax.random.normal(ks[10], (1, 3 * hidden_dim), jnp.float32)
    out_proj_w, out_proj_b = _init_linear(ks[11], hidden_dim, hidden_dim)
    return {
        "key_gen": tower(ks[0], ks[1], ks[2], key_dim),
        "val_gen": tower(ks[3], ks[4], ks[5], val_dim),
        "query_gen": tower(ks[6], ks[7], ks[8], query_dim),
        "in_proj_w": in_proj_w,
        "in_proj_b": in_proj_b,
        "out_proj_w": out_proj_w,
        "out_proj_b": out_proj_b,
    }


# ------------------------------------------------------------------ main
if __name__ == "__main__":
    key_dim, val_dim, query_dim = 12, 10, 14
    hidden_dim, num_heads, attnFCdim = 32, 4, 24
    B, S_kv, L_q = 2, 8, 6

    root = jax.random.PRNGKey(0)
    kp_, kk_, kv_, kq_ = jax.random.split(root, 4)
    params = init_params(kp_, key_dim, val_dim, query_dim,
                         hidden_dim, num_heads, attnFCdim)
    prep = prepare_params(params, num_heads)          # one-time packing

    keys_in = jax.random.normal(kk_, (B, S_kv, key_dim), jnp.float32)
    values_in = jax.random.normal(kv_, (B, S_kv, val_dim), jnp.float32)
    queries_in = jax.random.normal(kq_, (B, L_q, query_dim), jnp.float32)

    out = attention_block_forward(keys_in, values_in, queries_in, prep)
    out = jax.block_until_ready(out)

    ref = _ref_forward(keys_in, values_in, queries_in, params, num_heads)
    ref = jax.block_until_ready(ref)

    assert out.shape == (B, L_q, hidden_dim), out.shape
    # Exact softmax reciprocals now; remaining tolerance only covers default
    # f32 matmul pass-decomposition differences between Mosaic and XLA.
    assert jnp.allclose(out, ref, atol=1e-3, rtol=1e-3), \
        float(jnp.max(jnp.abs(out - ref)))

    print("KERNEL_OK")
</pallas_src>

<mosaic_0001>
module attributes {stable_mosaic.version = 11 : i64} {
  func.func @_attention_block_kernel(%arg0: memref<48x32xf32, #tpu.memory_space<vmem>>, %arg1: memref<464x32xf32, #tpu.memory_space<vmem>>, %arg2: memref<11x128xf32, #tpu.memory_space<vmem>>, %arg3: memref<16x128xf32, #tpu.memory_space<vmem>>) attributes {dimension_semantics = [], scalar_prefetch = 0 : i64, scratch_operands = 0 : i64, tpu.core_type = #tpu.core_type<tc>} {
    %c0 = arith.constant 0 : index
    %c0_0 = arith.constant 0 : index
    %0 = vector.load %arg2[%c0, %c0_0] : memref<11x128xf32, #tpu.memory_space<vmem>>, vector<11x128xf32>
    %c0_1 = arith.constant 0 : index
    %c0_2 = arith.constant 0 : index
    %1 = vector.load %arg0[%c0_1, %c0_2] : memref<48x32xf32, #tpu.memory_space<vmem>>, vector<16x32xf32>
    %c0_3 = arith.constant 0 : index
    %c0_4 = arith.constant 0 : index
    %2 = vector.load %arg1[%c0_3, %c0_4] : memref<464x32xf32, #tpu.memory_space<vmem>>, vector<24x32xf32>
    %c24 = arith.constant 24 : index
    %c0_5 = arith.constant 0 : index
    %3 = vector.load %arg1[%c24, %c0_5] : memref<464x32xf32, #tpu.memory_space<vmem>>, vector<24x32xf32>
    %4 = vector.extract_strided_slice %3 {offsets = [0, 0], sizes = [24, 24], strides = [1, 1]} : vector<24x32xf32> to vector<24x24xf32>
    %c48 = arith.constant 48 : index
    %c0_6 = arith.constant 0 : index
    %5 = vector.load %arg1[%c48, %c0_6] : memref<464x32xf32, #tpu.memory_space<vmem>>, vector<32x32xf32>
    %6 = vector.extract_strided_slice %5 {offsets = [0, 0], sizes = [32, 24], strides = [1, 1]} : vector<32x32xf32> to vector<32x24xf32>
    %7 = vector.extract_strided_slice %0 {offsets = [0, 0], sizes = [1, 24], strides = [1, 1]} : vector<11x128xf32> to vector<1x24xf32>
    %8 = vector.extract_strided_slice %0 {offsets = [1, 0], sizes = [1, 24], strides = [1, 1]} : vector<11x128xf32> to vector<1x24xf32>
    %9 = vector.extract_strided_slice %0 {offsets = [2, 0], sizes = [1, 32], strides = [1, 1]} : vector<11x128xf32> to vector<1x32xf32>
    %cst = arith.constant dense<0.000000e+00> : vector<16x24xf32>
    %10 = tpu.matmul %1, %2, %cst {dimension_numbers = #tpu.dot_dimension_numbers<[1], [1], [0], [0], [0, 0, 1, 0], [], []>} : vector<16x32xf32>, vector<24x32xf32>, vector<16x24xf32> -> vector<16x24xf32>
    %11 = vector.broadcast %7 : vector<1x24xf32> to vector<16x24xf32>
    %12 = arith.addf %10, %11 : vector<16x24xf32>
    %cst_7 = arith.constant 0.000000e+00 : f32
    %13 = vector.broadcast %cst_7 : f32 to vector<16x24xf32>
    %14 = arith.maximumf %12, %13 : vector<16x24xf32>
    %cst_8 = arith.constant dense<0.000000e+00> : vector<16x24xf32>
    %15 = tpu.matmul %14, %4, %cst_8 {dimension_numbers = #tpu.dot_dimension_numbers<[1], [1], [0], [0], [0, 0, 1, 0], [], []>} : vector<16x24xf32>, vector<24x24xf32>, vector<16x24xf32> -> vector<16x24xf32>
    %16 = vector.broadcast %8 : vector<1x24xf32> to vector<16x24xf32>
    %17 = arith.addf %15, %16 : vector<16x24xf32>
    %cst_9 = arith.constant 0.000000e+00 : f32
    %18 = vector.broadcast %cst_9 : f32 to vector<16x24xf32>
    %19 = arith.maximumf %17, %18 : vector<16x24xf32>
    %cst_10 = arith.constant dense<0.000000e+00> : vector<16x32xf32>
    %20 = tpu.matmul %19, %6, %cst_10 {dimension_numbers = #tpu.dot_dimension_numbers<[1], [1], [0], [0], [0, 0, 1, 0], [], []>} : vector<16x24xf32>, vector<32x24xf32>, vector<16x32xf32> -> vector<16x32xf32>
    %21 = vector.broadcast %9 : vector<1x32xf32> to vector<16x32xf32>
    %22 = arith.addf %20, %21 : vector<16x32xf32>
    %cst_11 = arith.constant 0.000000e+00 : f32
    %23 = vector.broadcast %cst_11 : f32 to vector<16x32xf32>
    %24 = arith.maximumf %22, %23 : vector<16x32xf32>
    %c16 = arith.constant 16 : index
    %c0_12 = arith.constant 0 : index
    %25 = vector.load %arg0[%c16, %c0_12] : memref<48x32xf32, #tpu.memory_space<vmem>>, vector<16x32xf32>
    %c80 = arith.constant 80 : index
    %c0_13 = arith.constant 0 : index
    %26 = vector.load %arg1[%c80, %c0_13] : memref<464x32xf32, #tpu.memory_space<vmem>>, vector<24x32xf32>
    %c104 = arith.constant 104 : index
    %c0_14 = arith.constant 0 : index
    %27 = vector.load %arg1[%c104, %c0_14] : memref<464x32xf32, #tpu.memory_space<vmem>>, vector<24x32xf32>
    %28 = vector.extract_strided_slice %27 {offsets = [0, 0], sizes = [24, 24], strides = [1, 1]} : vector<24x32xf32> to vector<24x24xf32>
    %c128 = arith.constant 128 : index
    %c0_15 = arith.constant 0 : index
    %29 = vector.load %arg1[%c128, %c0_15] : memref<464x32xf32, #tpu.memory_space<vmem>>, vector<32x32xf32>
    %30 = vector.extract_strided_slice %29 {offsets = [0, 0], sizes = [32, 24], strides = [1, 1]} : vector<32x32xf32> to vector<32x24xf32>
    %31 = vector.extract_strided_slice %0 {offsets = [3, 0], sizes = [1, 24], strides = [1, 1]} : vector<11x128xf32> to vector<1x24xf32>
    %32 = vector.extract_strided_slice %0 {offsets = [4, 0], sizes = [1, 24], strides = [1, 1]} : vector<11x128xf32> to vector<1x24xf32>
    %33 = vector.extract_strided_slice %0 {offsets = [5, 0], sizes = [1, 32], strides = [1, 1]} : vector<11x128xf32> to vector<1x32xf32>
    %cst_16 = arith.constant dense<0.000000e+00> : vector<16x24xf32>
    %34 = tpu.matmul %25, %26, %cst_16 {dimension_numbers = #tpu.dot_dimension_numbers<[1], [1], [0], [0], [0, 0, 1, 0], [], []>} : vector<16x32xf32>, vector<24x32xf32>, vector<16x24xf32> -> vector<16x24xf32>
    %35 = vector.broadcast %31 : vector<1x24xf32> to vector<16x24xf32>
    %36 = arith.addf %34, %35 : vector<16x24xf32>
    %cst_17 = arith.constant 0.000000e+00 : f32
    %37 = vector.broadcast %cst_17 : f32 to vector<16x24xf32>
    %38 = arith.maximumf %36, %37 : vector<16x24xf32>
    %cst_18 = arith.constant dense<0.000000e+00> : vector<16x24xf32>
    %39 = tpu.matmul %38, %28, %cst_18 {dimension_numbers = #tpu.dot_dimension_numbers<[1], [1], [0], [0], [0, 0, 1, 0], [], []>} : vector<16x24xf32>, vector<24x24xf32>, vector<16x24xf32> -> vector<16x24xf32>
    %40 = vector.broadcast %32 : vector<1x24xf32> to vector<16x24xf32>
    %41 = arith.addf %39, %40 : vector<16x24xf32>
    %cst_19 = arith.constant 0.000000e+00 : f32
    %42 = vector.broadcast %cst_19 : f32 to vector<16x24xf32>
    %43 = arith.maximumf %41, %42 : vector<16x24xf32>
    %cst_20 = arith.constant dense<0.000000e+00> : vector<16x32xf32>
    %44 = tpu.matmul %43, %30, %cst_20 {dimension_numbers = #tpu.dot_dimension_numbers<[1], [1], [0], [0], [0, 0, 1, 0], [], []>} : vector<16x24xf32>, vector<32x24xf32>, vector<16x32xf32> -> vector<16x32xf32>
    %45 = vector.broadcast %33 : vector<1x32xf32> to vector<16x32xf32>
    %46 = arith.addf %44, %45 : vector<16x32xf32>
    %cst_21 = arith.constant 0.000000e+00 : f32
    %47 = vector.broadcast %cst_21 : f32 to vector<16x32xf32>
    %48 = arith.maximumf %46, %47 : vector<16x32xf32>
    %c32 = arith.constant 32 : index
    %c0_22 = arith.constant 0 : index
    %49 = vector.load %arg0[%c32, %c0_22] : memref<48x32xf32, #tpu.memory_space<vmem>>, vector<16x32xf32>
    %c160 = arith.constant 160 : index
    %c0_23 = arith.constant 0 : index
    %50 = vector.load %arg1[%c160, %c0_23] : memref<464x32xf32, #tpu.memory_space<vmem>>, vector<24x32xf32>
    %c184 = arith.constant 184 : index
    %c0_24 = arith.constant 0 : index
    %51 = vector.load %arg1[%c184, %c0_24] : memref<464x32xf32, #tpu.memory_space<vmem>>, vector<24x32xf32>
    %52 = vector.extract_strided_slice %51 {offsets = [0, 0], sizes = [24, 24], strides = [1, 1]} : vector<24x32xf32> to vector<24x24xf32>
    %c208 = arith.constant 208 : index
    %c0_25 = arith.constant 0 : index
    %53 = vector.load %arg1[%c208, %c0_25] : memref<464x32xf32, #tpu.memory_space<vmem>>, vector<32x32xf32>
    %54 = vector.extract_strided_slice %53 {offsets = [0, 0], sizes = [32, 24], strides = [1, 1]} : vector<32x32xf32> to vector<32x24xf32>
    %55 = vector.extract_strided_slice %0 {offsets = [6, 0], sizes = [1, 24], strides = [1, 1]} : vector<11x128xf32> to vector<1x24xf32>
    %56 = vector.extract_strided_slice %0 {offsets = [7, 0], sizes = [1, 24], strides = [1, 1]} : vector<11x128xf32> to vector<1x24xf32>
    %57 = vector.extract_strided_slice %0 {offsets = [8, 0], sizes = [1, 32], strides = [1, 1]} : vector<11x128xf32> to vector<1x32xf32>
    %cst_26 = arith.constant dense<0.000000e+00> : vector<16x24xf32>
    %58 = tpu.matmul %49, %50, %cst_26 {dimension_numbers = #tpu.dot_dimension_numbers<[1], [1], [0], [0], [0, 0, 1, 0], [], []>} : vector<16x32xf32>, vector<24x32xf32>, vector<16x24xf32> -> vector<16x24xf32>
    %59 = vector.broadcast %55 : vector<1x24xf32> to vector<16x24xf32>
    %60 = arith.addf %58, %59 : vector<16x24xf32>
    %cst_27 = arith.constant 0.000000e+00 : f32
    %61 = vector.broadcast %cst_27 : f32 to vector<16x24xf32>
    %62 = arith.maximumf %60, %61 : vector<16x24xf32>
    %cst_28 = arith.constant dense<0.000000e+00> : vector<16x24xf32>
    %63 = tpu.matmul %62, %52, %cst_28 {dimension_numbers = #tpu.dot_dimension_numbers<[1], [1], [0], [0], [0, 0, 1, 0], [], []>} : vector<16x24xf32>, vector<24x24xf32>, vector<16x24xf32> -> vector<16x24xf32>
    %64 = vector.broadcast %56 : vector<1x24xf32> to vector<16x24xf32>
    %65 = arith.addf %63, %64 : vector<16x24xf32>
    %cst_29 = arith.constant 0.000000e+00 : f32
    %66 = vector.broadcast %cst_29 : f32 to vector<16x24xf32>
    %67 = arith.maximumf %65, %66 : vector<16x24xf32>
    %cst_30 = arith.constant dense<0.000000e+00> : vector<16x32xf32>
    %68 = tpu.matmul %67, %54, %cst_30 {dimension_numbers = #tpu.dot_dimension_numbers<[1], [1], [0], [0], [0, 0, 1, 0], [], []>} : vector<16x24xf32>, vector<32x24xf32>, vector<16x32xf32> -> vector<16x32xf32>
    %69 = vector.broadcast %57 : vector<1x32xf32> to vector<16x32xf32>
    %70 = arith.addf %68, %69 : vector<16x32xf32>
    %cst_31 = arith.constant dense<0xFF800000> : vector<16xf32>
    %71 = vector.multi_reduction <maximumf>, %70, %cst_31 [1] : vector<16x32xf32> to vector<16xf32>
    %72 = vector.shape_cast %71 : vector<16xf32> to vector<16x1xf32>
    %73 = vector.broadcast %72 : vector<16x1xf32> to vector<16x32xf32>
    %74 = arith.subf %70, %73 : vector<16x32xf32>
    %75 = math.exp %74 : vector<16x32xf32>
    %cst_32 = arith.constant dense<0.000000e+00> : vector<16xf32>
    %76 = vector.multi_reduction <add>, %75, %cst_32 [1] : vector<16x32xf32> to vector<16xf32>
    %77 = vector.shape_cast %76 : vector<16xf32> to vector<16x1xf32>
    %78 = vector.broadcast %77 : vector<16x1xf32> to vector<16x32xf32>
    %79 = arith.divf %75, %78 : vector<16x32xf32>
    %c240 = arith.constant 240 : index
    %c0_33 = arith.constant 0 : index
    %80 = vector.load %arg1[%c240, %c0_33] : memref<464x32xf32, #tpu.memory_space<vmem>>, vector<32x32xf32>
    %c272 = arith.constant 272 : index
    %c0_34 = arith.constant 0 : index
    %81 = vector.load %arg1[%c272, %c0_34] : memref<464x32xf32, #tpu.memory_space<vmem>>, vector<32x32xf32>
    %c304 = arith.constant 304 : index
    %c0_35 = arith.constant 0 : index
    %82 = vector.load %arg1[%c304, %c0_35] : memref<464x32xf32, #tpu.memory_space<vmem>>, vector<32x32xf32>
    %c336 = arith.constant 336 : index
    %c0_36 = arith.constant 0 : index
    %83 = vector.load %arg1[%c336, %c0_36] : memref<464x32xf32, #tpu.memory_space<vmem>>, vector<128x32xf32>
    %84 = vector.extract_strided_slice %0 {offsets = [9, 0], sizes = [1, 32], strides = [1, 1]} : vector<11x128xf32> to vector<1x32xf32>
    %85 = vector.extract_strided_slice %0 {offsets = [9, 32], sizes = [1, 32], strides = [1, 1]} : vector<11x128xf32> to vector<1x32xf32>
    %86 = vector.extract_strided_slice %0 {offsets = [9, 64], sizes = [1, 32], strides = [1, 1]} : vector<11x128xf32> to vector<1x32xf32>
    %87 = vector.extract_strided_slice %0 {offsets = [10, 0], sizes = [1, 128], strides = [1, 1]} : vector<11x128xf32> to vector<1x128xf32>
    %cst_37 = arith.constant dense<0.000000e+00> : vector<16x32xf32>
    %88 = tpu.matmul %79, %80, %cst_37 {dimension_numbers = #tpu.dot_dimension_numbers<[1], [1], [0], [0], [0, 0, 1, 0], [], []>} : vector<16x32xf32>, vector<32x32xf32>, vector<16x32xf32> -> vector<16x32xf32>
    %89 = vector.broadcast %84 : vector<1x32xf32> to vector<16x32xf32>
    %90 = arith.addf %88, %89 : vector<16x32xf32>
    %cst_38 = arith.constant dense<0.000000e+00> : vector<16x32xf32>
    %91 = tpu.matmul %24, %81, %cst_38 {dimension_numbers = #tpu.dot_dimension_numbers<[1], [1], [0], [0], [0, 0, 1, 0], [], []>} : vector<16x32xf32>, vector<32x32xf32>, vector<16x32xf32> -> vector<16x32xf32>
    %92 = vector.broadcast %85 : vector<1x32xf32> to vector<16x32xf32>
    %93 = arith.addf %91, %92 : vector<16x32xf32>
    %cst_39 = arith.constant dense<0.000000e+00> : vector<16x32xf32>
    %94 = tpu.matmul %48, %82, %cst_39 {dimension_numbers = #tpu.dot_dimension_numbers<[1], [1], [0], [0], [0, 0, 1, 0], [], []>} : vector<16x32xf32>, vector<32x32xf32>, vector<16x32xf32> -> vector<16x32xf32>
    %95 = vector.broadcast %86 : vector<1x32xf32> to vector<16x32xf32>
    %96 = arith.addf %94, %95 : vector<16x32xf32>
    %97 = tpu.iota {dimensions = array<i32: 0>} : vector<16x16xi32>
    %98 = tpu.iota {dimensions = array<i32: 1>} : vector<16x16xi32>
    %c0_i32 = arith.constant 0 : i32
    %99 = vector.broadcast %c0_i32 : i32 to vector<16x16xi32>
    %100 = arith.cmpi sge, %97, %99 : vector<16x16xi32>
    %c6_i32 = arith.constant 6 : i32
    %101 = vector.broadcast %c6_i32 : i32 to vector<16x16xi32>
    %102 = arith.cmpi slt, %97, %101 : vector<16x16xi32>
    %103 = arith.andi %100, %102 : vector<16x16xi1>
    %c0_i32_40 = arith.constant 0 : i32
    %104 = vector.broadcast %c0_i32_40 : i32 to vector<16x16xi32>
    %105 = arith.cmpi sge, %98, %104 : vector<16x16xi32>
    %c8_i32 = arith.constant 8 : i32
    %106 = vector.broadcast %c8_i32 : i32 to vector<16x16xi32>
    %107 = arith.cmpi slt, %98, %106 : vector<16x16xi32>
    %108 = arith.andi %105, %107 : vector<16x16xi1>
    %109 = arith.andi %103, %108 : vector<16x16xi1>
    %c6_i32_41 = arith.constant 6 : i32
    %110 = vector.broadcast %c6_i32_41 : i32 to vector<16x16xi32>
    %111 = arith.cmpi sge, %97, %110 : vector<16x16xi32>
    %c12_i32 = arith.constant 12 : i32
    %112 = vector.broadcast %c12_i32 : i32 to vector<16x16xi32>
    %113 = arith.cmpi slt, %97, %112 : vector<16x16xi32>
    %114 = arith.andi %111, %113 : vector<16x16xi1>
    %c8_i32_42 = arith.constant 8 : i32
    %115 = vector.broadcast %c8_i32_42 : i32 to vector<16x16xi32>
    %116 = arith.cmpi sge, %98, %115 : vector<16x16xi32>
    %c16_i32 = arith.constant 16 : i32
    %117 = vector.broadcast %c16_i32 : i32 to vector<16x16xi32>
    %118 = arith.cmpi slt, %98, %117 : vector<16x16xi32>
    %119 = arith.andi %116, %118 : vector<16x16xi1>
    %120 = arith.andi %114, %119 : vector<16x16xi1>
    %121 = arith.ori %109, %120 : vector<16x16xi1>
    %122 = vector.extract_strided_slice %90 {offsets = [0, 0], sizes = [16, 8], strides = [1, 1]} : vector<16x32xf32> to vector<16x8xf32>
    %123 = vector.extract_strided_slice %93 {offsets = [0, 0], sizes = [16, 8], strides = [1, 1]} : vector<16x32xf32> to vector<16x8xf32>
    %cst_43 = arith.constant dense<0.000000e+00> : vector<16x16xf32>
    %124 = tpu.matmul %122, %123, %cst_43 {dimension_numbers = #tpu.dot_dimension_numbers<[1], [1], [0], [0], [0, 0, 1, 0], [], []>} : vector<16x8xf32>, vector<16x8xf32>, vector<16x16xf32> -> vector<16x16xf32>
    %cst_44 = arith.constant -1.000000e+30 : f32
    %125 = vector.broadcast %cst_44 : f32 to vector<16x16xf32>
    %126 = arith.select %121, %124, %125 : vector<16x16xi1>, vector<16x16xf32>
    %cst_45 = arith.constant dense<0xFF800000> : vector<16xf32>
    %127 = vector.multi_reduction <maximumf>, %126, %cst_45 [1] : vector<16x16xf32> to vector<16xf32>
    %128 = vector.shape_cast %127 : vector<16xf32> to vector<16x1xf32>
    %129 = vector.broadcast %128 : vector<16x1xf32> to vector<16x16xf32>
    %130 = arith.subf %126, %129 : vector<16x16xf32>
    %131 = math.exp %130 : vector<16x16xf32>
    %cst_46 = arith.constant dense<0.000000e+00> : vector<16xf32>
    %132 = vector.multi_reduction <add>, %131, %cst_46 [1] : vector<16x16xf32> to vector<16xf32>
    %133 = vector.shape_cast %132 : vector<16xf32> to vector<16x1xf32>
    %134 = vector.broadcast %133 : vector<16x1xf32> to vector<16x16xf32>
    %135 = arith.divf %131, %134 : vector<16x16xf32>
    %136 = vector.extract_strided_slice %96 {offsets = [0, 0], sizes = [16, 8], strides = [1, 1]} : vector<16x32xf32> to vector<16x8xf32>
    %cst_47 = arith.constant dense<0.000000e+00> : vector<16x8xf32>
    %137 = tpu.matmul %135, %136, %cst_47 {dimension_numbers = #tpu.dot_dimension_numbers<[1], [0], [0], [1], [0, 0, 1, 1], [], []>} : vector<16x16xf32>, vector<16x8xf32>, vector<16x8xf32> -> vector<16x8xf32>
    %138 = vector.extract_strided_slice %90 {offsets = [0, 8], sizes = [16, 8], strides = [1, 1]} : vector<16x32xf32> to vector<16x8xf32>
    %139 = vector.extract_strided_slice %93 {offsets = [0, 8], sizes = [16, 8], strides = [1, 1]} : vector<16x32xf32> to vector<16x8xf32>
    %cst_48 = arith.constant dense<0.000000e+00> : vector<16x16xf32>
    %140 = tpu.matmul %138, %139, %cst_48 {dimension_numbers = #tpu.dot_dimension_numbers<[1], [1], [0], [0], [0, 0, 1, 0], [], []>} : vector<16x8xf32>, vector<16x8xf32>, vector<16x16xf32> -> vector<16x16xf32>
    %cst_49 = arith.constant -1.000000e+30 : f32
    %141 = vector.broadcast %cst_49 : f32 to vector<16x16xf32>
    %142 = arith.select %121, %140, %141 : vector<16x16xi1>, vector<16x16xf32>
    %cst_50 = arith.constant dense<0xFF800000> : vector<16xf32>
    %143 = vector.multi_reduction <maximumf>, %142, %cst_50 [1] : vector<16x16xf32> to vector<16xf32>
    %144 = vector.shape_cast %143 : vector<16xf32> to vector<16x1xf32>
    %145 = vector.broadcast %144 : vector<16x1xf32> to vector<16x16xf32>
    %146 = arith.subf %142, %145 : vector<16x16xf32>
    %147 = math.exp %146 : vector<16x16xf32>
    %cst_51 = arith.constant dense<0.000000e+00> : vector<16xf32>
    %148 = vector.multi_reduction <add>, %147, %cst_51 [1] : vector<16x16xf32> to vector<16xf32>
    %149 = vector.shape_cast %148 : vector<16xf32> to vector<16x1xf32>
    %150 = vector.broadcast %149 : vector<16x1xf32> to vector<16x16xf32>
    %151 = arith.divf %147, %150 : vector<16x16xf32>
    %152 = vector.extract_strided_slice %96 {offsets = [0, 8], sizes = [16, 8], strides = [1, 1]} : vector<16x32xf32> to vector<16x8xf32>
    %cst_52 = arith.constant dense<0.000000e+00> : vector<16x8xf32>
    %153 = tpu.matmul %151, %152, %cst_52 {dimension_numbers = #tpu.dot_dimension_numbers<[1], [0], [0], [1], [0, 0, 1, 1], [], []>} : vector<16x16xf32>, vector<16x8xf32>, vector<16x8xf32> -> vector<16x8xf32>
    %154 = vector.extract_strided_slice %90 {offsets = [0, 16], sizes = [16, 8], strides = [1, 1]} : vector<16x32xf32> to vector<16x8xf32>
    %155 = vector.extract_strided_slice %93 {offsets = [0, 16], sizes = [16, 8], strides = [1, 1]} : vector<16x32xf32> to vector<16x8xf32>
    %cst_53 = arith.constant dense<0.000000e+00> : vector<16x16xf32>
    %156 = tpu.matmul %154, %155, %cst_53 {dimension_numbers = #tpu.dot_dimension_numbers<[1], [1], [0], [0], [0, 0, 1, 0], [], []>} : vector<16x8xf32>, vector<16x8xf32>, vector<16x16xf32> -> vector<16x16xf32>
    %cst_54 = arith.constant -1.000000e+30 : f32
    %157 = vector.broadcast %cst_54 : f32 to vector<16x16xf32>
    %158 = arith.select %121, %156, %157 : vector<16x16xi1>, vector<16x16xf32>
    %cst_55 = arith.constant dense<0xFF800000> : vector<16xf32>
    %159 = vector.multi_reduction <maximumf>, %158, %cst_55 [1] : vector<16x16xf32> to vector<16xf32>
    %160 = vector.shape_cast %159 : vector<16xf32> to vector<16x1xf32>
    %161 = vector.broadcast %160 : vector<16x1xf32> to vector<16x16xf32>
    %162 = arith.subf %158, %161 : vector<16x16xf32>
    %163 = math.exp %162 : vector<16x16xf32>
    %cst_56 = arith.constant dense<0.000000e+00> : vector<16xf32>
    %164 = vector.multi_reduction <add>, %163, %cst_56 [1] : vector<16x16xf32> to vector<16xf32>
    %165 = vector.shape_cast %164 : vector<16xf32> to vector<16x1xf32>
    %166 = vector.broadcast %165 : vector<16x1xf32> to vector<16x16xf32>
    %167 = arith.divf %163, %166 : vector<16x16xf32>
    %168 = vector.extract_strided_slice %96 {offsets = [0, 16], sizes = [16, 8], strides = [1, 1]} : vector<16x32xf32> to vector<16x8xf32>
    %cst_57 = arith.constant dense<0.000000e+00> : vector<16x8xf32>
    %169 = tpu.matmul %167, %168, %cst_57 {dimension_numbers = #tpu.dot_dimension_numbers<[1], [0], [0], [1], [0, 0, 1, 1], [], []>} : vector<16x16xf32>, vector<16x8xf32>, vector<16x8xf32> -> vector<16x8xf32>
    %170 = vector.extract_strided_slice %90 {offsets = [0, 24], sizes = [16, 8], strides = [1, 1]} : vector<16x32xf32> to vector<16x8xf32>
    %171 = vector.extract_strided_slice %93 {offsets = [0, 24], sizes = [16, 8], strides = [1, 1]} : vector<16x32xf32> to vector<16x8xf32>
    %cst_58 = arith.constant dense<0.000000e+00> : vector<16x16xf32>
    %172 = tpu.matmul %170, %171, %cst_58 {dimension_numbers = #tpu.dot_dimension_numbers<[1], [1], [0], [0], [0, 0, 1, 0], [], []>} : vector<16x8xf32>, vector<16x8xf32>, vector<16x16xf32> -> vector<16x16xf32>
    %cst_59 = arith.constant -1.000000e+30 : f32
    %173 = vector.broadcast %cst_59 : f32 to vector<16x16xf32>
    %174 = arith.select %121, %172, %173 : vector<16x16xi1>, vector<16x16xf32>
    %cst_60 = arith.constant dense<0xFF800000> : vector<16xf32>
    %175 = vector.multi_reduction <maximumf>, %174, %cst_60 [1] : vector<16x16xf32> to vector<16xf32>
    %176 = vector.shape_cast %175 : vector<16xf32> to vector<16x1xf32>
    %177 = vector.broadcast %176 : vector<16x1xf32> to vector<16x16xf32>
    %178 = arith.subf %174, %177 : vector<16x16xf32>
    %179 = math.exp %178 : vector<16x16xf32>
    %cst_61 = arith.constant dense<0.000000e+00> : vector<16xf32>
    %180 = vector.multi_reduction <add>, %179, %cst_61 [1] : vector<16x16xf32> to vector<16xf32>
    %181 = vector.shape_cast %180 : vector<16xf32> to vector<16x1xf32>
    %182 = vector.broadcast %181 : vector<16x1xf32> to vector<16x16xf32>
    %183 = arith.divf %179, %182 : vector<16x16xf32>
    %184 = vector.extract_strided_slice %96 {offsets = [0, 24], sizes = [16, 8], strides = [1, 1]} : vector<16x32xf32> to vector<16x8xf32>
    %cst_62 = arith.constant dense<0.000000e+00> : vector<16x8xf32>
    %185 = tpu.matmul %183, %184, %cst_62 {dimension_numbers = #tpu.dot_dimension_numbers<[1], [0], [0], [1], [0, 0, 1, 1], [], []>} : vector<16x16xf32>, vector<16x8xf32>, vector<16x8xf32> -> vector<16x8xf32>
    %186 = tpu.concatenate %137, %153, %169, %185 in 1 : vector<16x8xf32>, vector<16x8xf32>, vector<16x8xf32>, vector<16x8xf32> -> vector<16x32xf32>
    %cst_63 = arith.constant dense<0.000000e+00> : vector<16x128xf32>
    %187 = tpu.matmul %186, %83, %cst_63 {dimension_numbers = #tpu.dot_dimension_numbers<[1], [1], [0], [0], [0, 0, 1, 0], [], []>} : vector<16x32xf32>, vector<128x32xf32>, vector<16x128xf32> -> vector<16x128xf32>
    %188 = vector.broadcast %87 : vector<1x128xf32> to vector<16x128xf32>
    %189 = arith.addf %187, %188 : vector<16x128xf32>
    %c0_64 = arith.constant 0 : index
    %c0_65 = arith.constant 0 : index
    %190 = vector.load %arg3[%c0_64, %c0_65] : memref<16x128xf32, #tpu.memory_space<vmem>>, vector<16x128xf32>
    tpu.vector_store %arg3[%c0_64, %c0_65], %189 {strides = array<i32>} : memref<16x128xf32, #tpu.memory_space<vmem>>, vector<16x128xf32>,
    return
  }
}

</mosaic_0001>

<llo_original>
// kernel: tpu_custom_call.1
$region0: #{tpu_custom_call.1}
  #allocation0 [shape = 'u32[]', space=smem, size = 0x4, offset = 0x4, fixed_abs, tag = 'smem constant byte address 0x4 - core index']
  #allocation1 [shape = 'u32[144,128]{1,0:T(1,128)}', space=vmem, size = 0x12000, scoped, tag = 'internal scratch']
  %s0 = inlined_call_operand.vmem [shape: f32[48,32], index: 0, kind: input, shape index: {}]
  %s1 = inlined_call_operand.vmem [shape: f32[464,32], index: 1, kind: input, shape index: {}]
  %s2 = inlined_call_operand.vmem [shape: f32[11,128], index: 2, kind: input, shape index: {}]
  %s3 = inlined_call_operand.hbm [shape: f32[16,128], index: 3, kind: output, shape index: {}]
  %s4 = sld [smem:[#allocation0]]
  $region22: #{tpu_custom_call.1} parent=0
    _
  %s6 = ssub.s32 1, %s4
  %s7 = scalar_select 0, %s6, %s4
  $region1: #{tpu_custom_call.1} parent=0
    #allocation2 [shape = 'u8[8192]{0}', space=vmem, size = 0x2000, scoped, tag = 'output window, operand 0, single buffered']
    #allocation3 [shape = 's32[1]{0}', space=sflag, size = 0x4, scoped, tag = 'scoped memory for tpu_custom_call.1']
    %8 = vsyncpa [#allocation3], 0
    // Predicated region
    $region2: #{tpu_custom_call.1} parent=1 // pred_check
      _
    $region3: #{tpu_custom_call.1} parent=1 // pred_check_branch
      %10 = sbr.rel (0) target = $region5
    $region4: #{tpu_custom_call.1} parent=1 // pred_region
      _
    $region5: #{tpu_custom_call.1} parent=1 // pred_fallthru
      _
    // Predicated region
    $region6: #{tpu_custom_call.1} parent=1 // pred_check
      _
    $region7: #{tpu_custom_call.1} parent=1 // pred_check_branch
      %12 = sbr.rel (0) target = $region9
    $region8: #{tpu_custom_call.1} parent=1 // pred_region
      _
    $region9: #{tpu_custom_call.1} parent=1 // pred_fallthru
      _
    // Predicated region
    $region10: #{tpu_custom_call.1} parent=1 // pred_check
      _
    $region11: #{tpu_custom_call.1} parent=1 // pred_check_branch
      %14 = sbr.rel (0) target = $region13
    $region12: #{tpu_custom_call.1} parent=1 // pred_region
      _
    $region13: #{tpu_custom_call.1} parent=1 // pred_fallthru
      _
    %v15 = vld [vmem:[%s2] sm:$0xff]
    %v16 = vld [vmem:[%s2 + $0x8] sm:$0x7]
    %v17 = vld [vmem:[%s0] sm:$0xff]
    %v18 = vld [vmem:[%s0 + $0x8] sm:$0xff]
    %v19 = vld [vmem:[%s1] sm:$0xff]
    %v20 = vld [vmem:[%s1 + $0x8] sm:$0xff]
    %v21 = vld [vmem:[%s1 + $0x10] sm:$0xff]
    %v22 = vld [vmem:[%s1 + $0x18] sm:$0xff]
    %v23 = vld [vmem:[%s1 + $0x20] sm:$0xff]
    %v24 = vld [vmem:[%s1 + $0x28] sm:$0xff]
    %v25 = vld [vmem:[%s1 + $0x30] sm:$0xff]
    %v26 = vld [vmem:[%s1 + $0x38] sm:$0xff]
    %v27 = vld [vmem:[%s1 + $0x40] sm:$0xff]
    %v28 = vld [vmem:[%s1 + $0x48] sm:$0xff]
    %v29 = vlaneseq
    %v30 = vshrl.u32 %v29, 7
    %v31 = vsub.s32 0, %v30
    %v32 = vrot.slane %v15, %v31
    %vm33 = vcmask 261120
    %v35 = vsel %vm33, %v17, 0
    %v38 = vsel %vm33, %v18, 0
    %v41 = vsel %vm33, %v19, 0
    %v44 = vsel %vm33, %v20, 0
    %v47 = vsel %vm33, %v21, 0
    %49 = vmatprep.subr.mxu0 0.0
    %50 = vmatpush1.xpose.msra.mxu0 %v41
    %51 = vmatprep.subr.mxu0 0.0
    %52 = vmatpush1.xpose.msra.mxu0 %v44
    %53 = vmatprep.subr.mxu0 0.0
    %54 = vmatpush1.xpose.msra.mxu0 %v47
    %55 = vmatprep.subr.mxu0 0.0
    %56 = vmatpush1.xpose.msra.mxu0 0.0
    %57 = vmatprep.subr.mxu0 0.0
    %58 = vmatpush1.xpose.msra.mxu0 0.0
    %59 = vmatprep.subr.mxu0 0.0
    %60 = vmatpush1.xpose.msra.mxu0 0.0
    %61 = vmatprep.subr.mxu0 0.0
    %62 = vmatpush1.xpose.msra.mxu0 0.0
    %63 = vmatprep.subr.mxu0 0.0
    %64 = vmatpush1.xpose.msra.mxu0 0.0
    %65 = vmatprep.subr.mxu0 0.0
    %66 = vmatpush1.xpose.msra.mxu0 0.0
    %67 = vmatprep.subr.mxu0 0.0
    %68 = vmatpush1.xpose.msra.mxu0 0.0
    %69 = vmatprep.subr.mxu0 0.0
    %70 = vmatpush1.xpose.msra.mxu0 0.0
    %71 = vmatprep.subr.mxu0 0.0
    %72 = vmatpush1.xpose.msra.mxu0 0.0
    %73 = vmatprep.subr.mxu0 0.0
    %74 = vmatpush1.xpose.msra.mxu0 0.0
    %75 = vmatprep.subr.mxu0 0.0
    %76 = vmatpush1.xpose.msra.mxu0 0.0
    %77 = vmatprep.subr.mxu0 0.0
    %78 = vmatpush1.xpose.msra.mxu0 0.0
    %79 = vmatprep.subr.mxu0 0.0
    %80 = vmatpush1.xpose.msra.mxu0 0.0
    %81 = vmatprep.subr.mxu0 0.0
    %82 = vmatpush1.xpose.msra.mxu0 0.0
    %83 = vmatprep.subr.mxu0 0.0
    %84 = vmatpush1.xpose.msra.mxu0 0.0
    %85 = vmatprep.subr.mxu0 0.0
    %86 = vmatpush1.xpose.msra.mxu0 0.0
    %87 = vmatprep.subr.mxu0 0.0
    %88 = vmatpush1.xpose.msra.mxu0 0.0
    %89 = vmatprep.subr.mxu0 0.0
    %90 = vmatpush1.xpose.msra.mxu0 0.0
    %91 = vmatprep.subr.mxu0 0.0
    %92 = vmatpush1.xpose.msra.mxu0 0.0
    %93 = vmatprep.subr.mxu0 0.0
    %94 = vmatpush1.xpose.msra.mxu0 0.0
    %95 = vmatprep.subr.mxu0 0.0
    %96 = vmatpush1.xpose.msra.mxu0 0.0
    %97 = vmatprep.subr.mxu0 0.0
    %98 = vmatpush1.xpose.msra.mxu0 0.0
    %99 = vmatprep.subr.mxu0 0.0
    %100 = vmatpush1.xpose.msra.mxu0 0.0
    %101 = vmatprep.subr.mxu0 0.0
    %102 = vmatpush1.xpose.msra.mxu0 0.0
    %103 = vmatprep.subr.mxu0 0.0
    %104 = vmatpush1.xpose.msra.mxu0 0.0
    %105 = vmatprep.subr.mxu0 0.0
    %106 = vmatpush1.xpose.msra.mxu0 0.0
    %107 = vmatprep.subr.mxu0 0.0
    %108 = vmatpush1.xpose.msra.mxu0 0.0
    %109 = vmatprep.subr.mxu0 0.0
    %110 = vmatpush1.xpose.msra.mxu0 0.0
    %111 = vmatprep.subr.mxu0 0.0
    %112 = vmatpush1.xpose.msra.mxu0 0.0
    %113 = vmatprep.mubr.f32.mxu0 0.0
    %114 = vmatmul.mubr.f32.gmra.mrb[0].mxu0 %v35
    %v115 = vpop.f32.mrb[0].mxu0
    %v116 = vadd.f32 %v32, %v115
    %v117 = vpop.f32.mrb[0].mxu0
    %118 = vmatprep.mubr.f32.mxu0 0.0
    %119 = vmatmul.mubr.f32.gmra.mrb[0].mxu0 %v38
    %v120 = vpop.f32.mrb[0].mxu0
    %v121 = vadd.f32 %v32, %v120
    %v122 = vpop.f32.mrb[0].mxu0
    %123 = vdwg.mxu0
    %v124 = vmax.f32 %v116, 0.0
    %v125 = vmax.f32 %v121, 0.0
    %v126 = vlaneseq
    %v127 = vshrl.u32 %v126, 7
    %v128 = vsub.s32 1, %v127
    %v129 = vrot.slane %v15, %v128
    %vm130 = vcmask 195584
    %v132 = vsel %vm130, %v124, 0
    %v135 = vsel %vm130, %v125, 0
    %v138 = vsel %vm130, %v22, 0
    %v141 = vsel %vm130, %v23, 0
    %v144 = vsel %vm130, %v24, 0
    %146 = vmatprep.subr.mxu0 0.0
    %147 = vmatpush1.xpose.msra.mxu0 %v138
    %148 = vmatprep.subr.mxu0 0.0
    %149 = vmatpush1.xpose.msra.mxu0 %v141
    %150 = vmatprep.subr.mxu0 0.0
    %151 = vmatpush1.xpose.msra.mxu0 %v144
    %152 = vmatprep.subr.mxu0 0.0
    %153 = vmatpush1.xpose.msra.mxu0 0.0
    %154 = vmatprep.subr.mxu0 0.0
    %155 = vmatpush1.xpose.msra.mxu0 0.0
    %156 = vmatprep.subr.mxu0 0.0
    %157 = vmatpush1.xpose.msra.mxu0 0.0
    %158 = vmatprep.subr.mxu0 0.0
    %159 = vmatpush1.xpose.msra.mxu0 0.0
    %160 = vmatprep.subr.mxu0 0.0
    %161 = vmatpush1.xpose.msra.mxu0 0.0
    %162 = vmatprep.subr.mxu0 0.0
    %163 = vmatpush1.xpose.msra.mxu0 0.0
    %164 = vmatprep.subr.mxu0 0.0
    %165 = vmatpush1.xpose.msra.mxu0 0.0
    %166 = vmatprep.subr.mxu0 0.0
    %167 = vmatpush1.xpose.msra.mxu0 0.0
    %168 = vmatprep.subr.mxu0 0.0
    %169 = vmatpush1.xpose.msra.mxu0 0.0
    %170 = vmatprep.subr.mxu0 0.0
    %171 = vmatpush1.xpose.msra.mxu0 0.0
    %172 = vmatprep.subr.mxu0 0.0
    %173 = vmatpush1.xpose.msra.mxu0 0.0
    %174 = vmatprep.subr.mxu0 0.0
    %175 = vmatpush1.xpose.msra.mxu0 0.0
    %176 = vmatprep.subr.mxu0 0.0
    %177 = vmatpush1.xpose.msra.mxu0 0.0
    %178 = vmatprep.subr.mxu0 0.0
    %179 = vmatpush1.xpose.msra.mxu0 0.0
    %180 = vmatprep.subr.mxu0 0.0
    %181 = vmatpush1.xpose.msra.mxu0 0.0
    %182 = vmatprep.subr.mxu0 0.0
    %183 = vmatpush1.xpose.msra.mxu0 0.0
    %184 = vmatprep.subr.mxu0 0.0
    %185 = vmatpush1.xpose.msra.mxu0 0.0
    %186 = vmatprep.subr.mxu0 0.0
    %187 = vmatpush1.xpose.msra.mxu0 0.0
    %188 = vmatprep.subr.mxu0 0.0
    %189 = vmatpush1.xpose.msra.mxu0 0.0
    %190 = vmatprep.subr.mxu0 0.0
    %191 = vmatpush1.xpose.msra.mxu0 0.0
    %192 = vmatprep.subr.mxu0 0.0
    %193 = vmatpush1.xpose.msra.mxu0 0.0
    %194 = vmatprep.subr.mxu0 0.0
    %195 = vmatpush1.xpose.msra.mxu0 0.0
    %196 = vmatprep.subr.mxu0 0.0
    %197 = vmatpush1.xpose.msra.mxu0 0.0
    %198 = vmatprep.subr.mxu0 0.0
    %199 = vmatpush1.xpose.msra.mxu0 0.0
    %200 = vmatprep.subr.mxu0 0.0
    %201 = vmatpush1.xpose.msra.mxu0 0.0
    %202 = vmatprep.subr.mxu0 0.0
    %203 = vmatpush1.xpose.msra.mxu0 0.0
    %204 = vmatprep.subr.mxu0 0.0
    %205 = vmatpush1.xpose.msra.mxu0 0.0
    %206 = vmatprep.subr.mxu0 0.0
    %207 = vmatpush1.xpose.msra.mxu0 0.0
    %208 = vmatprep.subr.mxu0 0.0
    %209 = vmatpush1.xpose.msra.mxu0 0.0
    %210 = vmatprep.mubr.f32.mxu0 0.0
    %211 = vmatmul.mubr.f32.gmra.mrb[0].mxu0 %v132
    %v212 = vpop.f32.mrb[0].mxu0
    %v213 = vadd.f32 %v129, %v212
    %v214 = vpop.f32.mrb[0].mxu0
    %215 = vmatprep.mubr.f32.mxu0 0.0
    %216 = vmatmul.mubr.f32.gmra.mrb[0].mxu0 %v135
    %v217 = vpop.f32.mrb[0].mxu0
    %v218 = vadd.f32 %v129, %v217
    %v219 = vpop.f32.mrb[0].mxu0
    %220 = vdwg.mxu0
    %v221 = vmax.f32 %v213, 0.0
    %v222 = vmax.f32 %v218, 0.0
    %v223 = vlaneseq
    %v224 = vshrl.u32 %v223, 7
    %v225 = vsub.s32 2, %v224
    %v226 = vrot.slane %v15, %v225
    %v228 = vsel %vm130, %v221, 0
    %v231 = vsel %vm130, %v222, 0
    %v234 = vsel %vm130, %v25, 0
    %v237 = vsel %vm130, %v26, 0
    %v240 = vsel %vm130, %v27, 0
    %v243 = vsel %vm130, %v28, 0
    %245 = vmatprep.subr.mxu0 0.0
    %246 = vmatpush1.xpose.msra.mxu0 %v234
    %247 = vmatprep.subr.mxu0 0.0
    %248 = vmatpush1.xpose.msra.mxu0 %v237
    %249 = vmatprep.subr.mxu0 0.0
    %250 = vmatpush1.xpose.msra.mxu0 %v240
    %251 = vmatprep.subr.mxu0 0.0
    %252 = vmatpush1.xpose.msra.mxu0 %v243
    %253 = vmatprep.subr.mxu0 0.0
    %254 = vmatpush1.xpose.msra.mxu0 0.0
    %255 = vmatprep.subr.mxu0 0.0
    %256 = vmatpush1.xpose.msra.mxu0 0.0
    %257 = vmatprep.subr.mxu0 0.0
    %258 = vmatpush1.xpose.msra.mxu0 0.0
    %259 = vmatprep.subr.mxu0 0.0
    %260 = vmatpush1.xpose.msra.mxu0 0.0
    %261 = vmatprep.subr.mxu0 0.0
    %262 = vmatpush1.xpose.msra.mxu0 0.0
    %263 = vmatprep.subr.mxu0 0.0
    %264 = vmatpush1.xpose.msra.mxu0 0.0
    %265 = vmatprep.subr.mxu0 0.0
    %266 = vmatpush1.xpose.msra.mxu0 0.0
    %267 = vmatprep.subr.mxu0 0.0
    %268 = vmatpush1.xpose.msra.mxu0 0.0
    %269 = vmatprep.subr.mxu0 0.0
    %270 = vmatpush1.xpose.msra.mxu0 0.0
    %271 = vmatprep.subr.mxu0 0.0
    %272 = vmatpush1.xpose.msra.mxu0 0.0
    %273 = vmatprep.subr.mxu0 0.0
    %274 = vmatpush1.xpose.msra.mxu0 0.0
    %275 = vmatprep.subr.mxu0 0.0
    %276 = vmatpush1.xpose.msra.mxu0 0.0
    %277 = vmatprep.subr.mxu0 0.0
    %278 = vmatpush1.xpose.msra.mxu0 0.0
    %279 = vmatprep.subr.mxu0 0.0
    %280 = vmatpush1.xpose.msra.mxu0 0.0
    %281 = vmatprep.subr.mxu0 0.0
    %282 = vmatpush1.xpose.msra.mxu0 0.0
    %283 = vmatprep.subr.mxu0 0.0
    %284 = vmatpush1.xpose.msra.mxu0 0.0
    %285 = vmatprep.subr.mxu0 0.0
    %286 = vmatpush1.xpose.msra.mxu0 0.0
    %287 = vmatprep.subr.mxu0 0.0
    %288 = vmatpush1.xpose.msra.mxu0 0.0
    %289 = vmatprep.subr.mxu0 0.0
    %290 = vmatpush1.xpose.msra.mxu0 0.0
    %291 = vmatprep.subr.mxu0 0.0
    %292 = vmatpush1.xpose.msra.mxu0 0.0
    %293 = vmatprep.subr.mxu0 0.0
    %294 = vmatpush1.xpose.msra.mxu0 0.0
    %295 = vmatprep.subr.mxu0 0.0
    %296 = vmatpush1.xpose.msra.mxu0 0.0
    %297 = vmatprep.subr.mxu0 0.0
    %298 = vmatpush1.xpose.msra.mxu0 0.0
    %299 = vmatprep.subr.mxu0 0.0
    %300 = vmatpush1.xpose.msra.mxu0 0.0
    %301 = vmatprep.subr.mxu0 0.0
    %302 = vmatpush1.xpose.msra.mxu0 0.0
    %303 = vmatprep.subr.mxu0 0.0
    %304 = vmatpush1.xpose.msra.mxu0 0.0
    %305 = vmatprep.subr.mxu0 0.0
    %306 = vmatpush1.xpose.msra.mxu0 0.0
    %307 = vmatprep.subr.mxu0 0.0
    %308 = vmatpush1.xpose.msra.mxu0 0.0
    %309 = vmatprep.mubr.f32.mxu0 0.0
    %310 = vmatmul.mubr.f32.gmra.mrb[0].mxu0 %v228
    %v311 = vpop.f32.mrb[0].mxu0
    %v312 = vadd.f32 %v226, %v311
    %v313 = vpop.f32.mrb[0].mxu0
    %314 = vmatprep.mubr.f32.mxu0 0.0
    %315 = vmatmul.mubr.f32.gmra.mrb[0].mxu0 %v231
    %v316 = vpop.f32.mrb[0].mxu0
    %v317 = vadd.f32 %v226, %v316
    %v318 = vpop.f32.mrb[0].mxu0
    %319 = vdwg.mxu0
    %v320 = vmax.f32 %v312, 0.0
    %v321 = vmax.f32 %v317, 0.0
    %v322 = vld [vmem:[%s0 + $0x10] sm:$0xff]
    %v323 = vld [vmem:[%s0 + $0x18] sm:$0xff]
    %v324 = vld [vmem:[%s1 + $0x50] sm:$0xff]
    %v325 = vld [vmem:[%s1 + $0x58] sm:$0xff]
    %v326 = vld [vmem:[%s1 + $0x60] sm:$0xff]
    %v327 = vld [vmem:[%s1 + $0x68] sm:$0xff]
    %v328 = vld [vmem:[%s1 + $0x70] sm:$0xff]
    %v329 = vld [vmem:[%s1 + $0x78] sm:$0xff]
    %v330 = vld [vmem:[%s1 + $0x80] sm:$0xff]
    %v331 = vld [vmem:[%s1 + $0x88] sm:$0xff]
    %v332 = vld [vmem:[%s1 + $0x90] sm:$0xff]
    %v333 = vld [vmem:[%s1 + $0x98] sm:$0xff]
    %v334 = vlaneseq
    %v335 = vshrl.u32 %v334, 7
    %v336 = vsub.s32 3, %v335
    %v337 = vrot.slane %v15, %v336
    %v339 = vsel %vm33, %v322, 0
    %v342 = vsel %vm33, %v323, 0
    %v345 = vsel %vm33, %v324, 0
    %v348 = vsel %vm33, %v325, 0
    %v351 = vsel %vm33, %v326, 0
    %353 = vmatprep.subr.mxu0 0.0
    %354 = vmatpush1.xpose.msra.mxu0 %v345
    %355 = vmatprep.subr.mxu0 0.0
    %356 = vmatpush1.xpose.msra.mxu0 %v348
    %357 = vmatprep.subr.mxu0 0.0
    %358 = vmatpush1.xpose.msra.mxu0 %v351
    %359 = vmatprep.subr.mxu0 0.0
    %360 = vmatpush1.xpose.msra.mxu0 0.0
    %361 = vmatprep.subr.mxu0 0.0
    %362 = vmatpush1.xpose.msra.mxu0 0.0
    %363 = vmatprep.subr.mxu0 0.0
    %364 = vmatpush1.xpose.msra.mxu0 0.0
    %365 = vmatprep.subr.mxu0 0.0
    %366 = vmatpush1.xpose.msra.mxu0 0.0
    %367 = vmatprep.subr.mxu0 0.0
    %368 = vmatpush1.xpose.msra.mxu0 0.0
    %369 = vmatprep.subr.mxu0 0.0
    %370 = vmatpush1.xpose.msra.mxu0 0.0
    %371 = vmatprep.subr.mxu0 0.0
    %372 = vmatpush1.xpose.msra.mxu0 0.0
    %373 = vmatprep.subr.mxu0 0.0
    %374 = vmatpush1.xpose.msra.mxu0 0.0
    %375 = vmatprep.subr.mxu0 0.0
    %376 = vmatpush1.xpose.msra.mxu0 0.0
    %377 = vmatprep.subr.mxu0 0.0
    %378 = vmatpush1.xpose.msra.mxu0 0.0
    %379 = vmatprep.subr.mxu0 0.0
    %380 = vmatpush1.xpose.msra.mxu0 0.0
    %381 = vmatprep.subr.mxu0 0.0
    %382 = vmatpush1.xpose.msra.mxu0 0.0
    %383 = vmatprep.subr.mxu0 0.0
    %384 = vmatpush1.xpose.msra.mxu0 0.0
    %385 = vmatprep.subr.mxu0 0.0
    %386 = vmatpush1.xpose.msra.mxu0 0.0
    %387 = vmatprep.subr.mxu0 0.0
    %388 = vmatpush1.xpose.msra.mxu0 0.0
    %389 = vmatprep.subr.mxu0 0.0
    %390 = vmatpush1.xpose.msra.mxu0 0.0
    %391 = vmatprep.subr.mxu0 0.0
    %392 = vmatpush1.xpose.msra.mxu0 0.0
    %393 = vmatprep.subr.mxu0 0.0
    %394 = vmatpush1.xpose.msra.mxu0 0.0
    %395 = vmatprep.subr.mxu0 0.0
    %396 = vmatpush1.xpose.msra.mxu0 0.0
    %397 = vmatprep.subr.mxu0 0.0
    %398 = vmatpush1.xpose.msra.mxu0 0.0
    %399 = vmatprep.subr.mxu0 0.0
    %400 = vmatpush1.xpose.msra.mxu0 0.0
    %401 = vmatprep.subr.mxu0 0.0
    %402 = vmatpush1.xpose.msra.mxu0 0.0
    %403 = vmatprep.subr.mxu0 0.0
    %404 = vmatpush1.xpose.msra.mxu0 0.0
    %405 = vmatprep.subr.mxu0 0.0
    %406 = vmatpush1.xpose.msra.mxu0 0.0
    %407 = vmatprep.subr.mxu0 0.0
    %408 = vmatpush1.xpose.msra.mxu0 0.0
    %409 = vmatprep.subr.mxu0 0.0
    %410 = vmatpush1.xpose.msra.mxu0 0.0
    %411 = vmatprep.subr.mxu0 0.0
    %412 = vmatpush1.xpose.msra.mxu0 0.0
    %413 = vmatprep.subr.mxu0 0.0
    %414 = vmatpush1.xpose.msra.mxu0 0.0
    %415 = vmatprep.subr.mxu0 0.0
    %416 = vmatpush1.xpose.msra.mxu0 0.0
    %417 = vmatprep.mubr.f32.mxu0 0.0
    %418 = vmatmul.mubr.f32.gmra.mrb[0].mxu0 %v339
    %v419 = vpop.f32.mrb[0].mxu0
    %v420 = vadd.f32 %v337, %v419
    %v421 = vpop.f32.mrb[0].mxu0
    %422 = vmatprep.mubr.f32.mxu0 0.0
    %423 = vmatmul.mubr.f32.gmra.mrb[0].mxu0 %v342
    %v424 = vpop.f32.mrb[0].mxu0
    %v425 = vadd.f32 %v337, %v424
    %v426 = vpop.f32.mrb[0].mxu0
    %427 = vdwg.mxu0
    %v428 = vmax.f32 %v420, 0.0
    %v429 = vmax.f32 %v425, 0.0
    %v430 = vlaneseq
    %v431 = vshrl.u32 %v430, 7
    %v432 = vsub.s32 4, %v431
    %v433 = vrot.slane %v15, %v432
    %v435 = vsel %vm130, %v428, 0
    %v438 = vsel %vm130, %v429, 0
    %v441 = vsel %vm130, %v327, 0
    %v444 = vsel %vm130, %v328, 0
    %v447 = vsel %vm130, %v329, 0
    %449 = vmatprep.subr.mxu0 0.0
    %450 = vmatpush1.xpose.msra.mxu0 %v441
    %451 = vmatprep.subr.mxu0 0.0
    %452 = vmatpush1.xpose.msra.mxu0 %v444
    %453 = vmatprep.subr.mxu0 0.0
    %454 = vmatpush1.xpose.msra.mxu0 %v447
    %455 = vmatprep.subr.mxu0 0.0
    %456 = vmatpush1.xpose.msra.mxu0 0.0
    %457 = vmatprep.subr.mxu0 0.0
    %458 = vmatpush1.xpose.msra.mxu0 0.0
    %459 = vmatprep.subr.mxu0 0.0
    %460 = vmatpush1.xpose.msra.mxu0 0.0
    %461 = vmatprep.subr.mxu0 0.0
    %462 = vmatpush1.xpose.msra.mxu0 0.0
    %463 = vmatprep.subr.mxu0 0.0
    %464 = vmatpush1.xpose.msra.mxu0 0.0
    %465 = vmatprep.subr.mxu0 0.0
    %466 = vmatpush1.xpose.msra.mxu0 0.0
    %467 = vmatprep.subr.mxu0 0.0
    %468 = vmatpush1.xpose.msra.mxu0 0.0
    %469 = vmatprep.subr.mxu0 0.0
    %470 = vmatpush1.xpose.msra.mxu0 0.0
    %471 = vmatprep.subr.mxu0 0.0
    %472 = vmatpush1.xpose.msra.mxu0 0.0
    %473 = vmatprep.subr.mxu0 0.0
    %474 = vmatpush1.xpose.msra.mxu0 0.0
    %475 = vmatprep.subr.mxu0 0.0
    %476 = vmatpush1.xpose.msra.mxu0 0.0
    %477 = vmatprep.subr.mxu0 0.0
    %478 = vmatpush1.xpose.msra.mxu0 0.0
    %479 = vmatprep.subr.mxu0 0.0
    %480 = vmatpush1.xpose.msra.mxu0 0.0
    %481 = vmatprep.subr.mxu0 0.0
    %482 = vmatpush1.xpose.msra.mxu0 0.0
    %483 = vmatprep.subr.mxu0 0.0
    %484 = vmatpush1.xpose.msra.mxu0 0.0
    %485 = vmatprep.subr.mxu0 0.0
    %486 = vmatpush1.xpose.msra.mxu0 0.0
    %487 = vmatprep.subr.mxu0 0.0
    %488 = vmatpush1.xpose.msra.mxu0 0.0
    %489 = vmatprep.subr.mxu0 0.0
    %490 = vmatpush1.xpose.msra.mxu0 0.0
    %491 = vmatprep.subr.mxu0 0.0
    %492 = vmatpush1.xpose.msra.mxu0 0.0
    %493 = vmatprep.subr.mxu0 0.0
    %494 = vmatpush1.xpose.msra.mxu0 0.0
    %495 = vmatprep.subr.mxu0 0.0
    %496 = vmatpush1.xpose.msra.mxu0 0.0
    %497 = vmatprep.subr.mxu0 0.0
    %498 = vmatpush1.xpose.msra.mxu0 0.0
    %499 = vmatprep.subr.mxu0 0.0
    %500 = vmatpush1.xpose.msra.mxu0 0.0
    %501 = vmatprep.subr.mxu0 0.0
    %502 = vmatpush1.xpose.msra.mxu0 0.0
    %503 = vmatprep.subr.mxu0 0.0
    %504 = vmatpush1.xpose.msra.mxu0 0.0
    %505 = vmatprep.subr.mxu0 0.0
    %506 = vmatpush1.xpose.msra.mxu0 0.0
    %507 = vmatprep.subr.mxu0 0.0
    %508 = vmatpush1.xpose.msra.mxu0 0.0
    %509 = vmatprep.subr.mxu0 0.0
    %510 = vmatpush1.xpose.msra.mxu0 0.0
    %511 = vmatprep.subr.mxu0 0.0
    %512 = vmatpush1.xpose.msra.mxu0 0.0
    %513 = vmatprep.mubr.f32.mxu0 0.0
    %514 = vmatmul.mubr.f32.gmra.mrb[0].mxu0 %v435
    %v515 = vpop.f32.mrb[0].mxu0
    %v516 = vadd.f32 %v433, %v515
    %v517 = vpop.f32.mrb[0].mxu0
    %518 = vmatprep.mubr.f32.mxu0 0.0
    %519 = vmatmul.mubr.f32.gmra.mrb[0].mxu0 %v438
    %v520 = vpop.f32.mrb[0].mxu0
    %v521 = vadd.f32 %v433, %v520
    %v522 = vpop.f32.mrb[0].mxu0
    %523 = vdwg.mxu0
    %v524 = vmax.f32 %v516, 0.0
    %v525 = vmax.f32 %v521, 0.0
    %v526 = vlaneseq
    %v527 = vshrl.u32 %v526, 7
    %v528 = vsub.s32 5, %v527
    %v529 = vrot.slane %v15, %v528
    %v531 = vsel %vm130, %v524, 0
    %v534 = vsel %vm130, %v525, 0
    %v537 = vsel %vm130, %v330, 0
    %v540 = vsel %vm130, %v331, 0
    %v543 = vsel %vm130, %v332, 0
    %v546 = vsel %vm130, %v333, 0
    %548 = vmatprep.subr.mxu0 0.0
    %549 = vmatpush1.xpose.msra.mxu0 %v537
    %550 = vmatprep.subr.mxu0 0.0
    %551 = vmatpush1.xpose.msra.mxu0 %v540
    %552 = vmatprep.subr.mxu0 0.0
    %553 = vmatpush1.xpose.msra.mxu0 %v543
    %554 = vmatprep.subr.mxu0 0.0
    %555 = vmatpush1.xpose.msra.mxu0 %v546
    %556 = vmatprep.subr.mxu0 0.0
    %557 = vmatpush1.xpose.msra.mxu0 0.0
    %558 = vmatprep.subr.mxu0 0.0
    %559 = vmatpush1.xpose.msra.mxu0 0.0
    %560 = vmatprep.subr.mxu0 0.0
    %561 = vmatpush1.xpose.msra.mxu0 0.0
    %562 = vmatprep.subr.mxu0 0.0
    %563 = vmatpush1.xpose.msra.mxu0 0.0
    %564 = vmatprep.subr.mxu0 0.0
    %565 = vmatpush1.xpose.msra.mxu0 0.0
    %566 = vmatprep.subr.mxu0 0.0
    %567 = vmatpush1.xpose.msra.mxu0 0.0
    %568 = vmatprep.subr.mxu0 0.0
    %569 = vmatpush1.xpose.msra.mxu0 0.0
    %570 = vmatprep.subr.mxu0 0.0
    %571 = vmatpush1.xpose.msra.mxu0 0.0
    %572 = vmatprep.subr.mxu0 0.0
    %573 = vmatpush1.xpose.msra.mxu0 0.0
    %574 = vmatprep.subr.mxu0 0.0
    %575 = vmatpush1.xpose.msra.mxu0 0.0
    %576 = vmatprep.subr.mxu0 0.0
    %577 = vmatpush1.xpose.msra.mxu0 0.0
    %578 = vmatprep.subr.mxu0 0.0
    %579 = vmatpush1.xpose.msra.mxu0 0.0
    %580 = vmatprep.subr.mxu0 0.0
    %581 = vmatpush1.xpose.msra.mxu0 0.0
    %582 = vmatprep.subr.mxu0 0.0
    %583 = vmatpush1.xpose.msra.mxu0 0.0
    %584 = vmatprep.subr.mxu0 0.0
    %585 = vmatpush1.xpose.msra.mxu0 0.0
    %586 = vmatprep.subr.mxu0 0.0
    %587 = vmatpush1.xpose.msra.mxu0 0.0
    %588 = vmatprep.subr.mxu0 0.0
    %589 = vmatpush1.xpose.msra.mxu0 0.0
    %590 = vmatprep.subr.mxu0 0.0
    %591 = vmatpush1.xpose.msra.mxu0 0.0
    %592 = vmatprep.subr.mxu0 0.0
    %593 = vmatpush1.xpose.msra.mxu0 0.0
    %594 = vmatprep.subr.mxu0 0.0
    %595 = vmatpush1.xpose.msra.mxu0 0.0
    %596 = vmatprep.subr.mxu0 0.0
    %597 = vmatpush1.xpose.msra.mxu0 0.0
    %598 = vmatprep.subr.mxu0 0.0
    %599 = vmatpush1.xpose.msra.mxu0 0.0
    %600 = vmatprep.subr.mxu0 0.0
    %601 = vmatpush1.xpose.msra.mxu0 0.0
    %602 = vmatprep.subr.mxu0 0.0
    %603 = vmatpush1.xpose.msra.mxu0 0.0
    %604 = vmatprep.subr.mxu0 0.0
    %605 = vmatpush1.xpose.msra.mxu0 0.0
    %606 = vmatprep.subr.mxu0 0.0
    %607 = vmatpush1.xpose.msra.mxu0 0.0
    %608 = vmatprep.subr.mxu0 0.0
    %609 = vmatpush1.xpose.msra.mxu0 0.0
    %610 = vmatprep.subr.mxu0 0.0
    %611 = vmatpush1.xpose.msra.mxu0 0.0
    %612 = vmatprep.mubr.f32.mxu0 0.0
    %613 = vmatmul.mubr.f32.gmra.mrb[0].mxu0 %v531
    %v614 = vpop.f32.mrb[0].mxu0
    %v615 = vadd.f32 %v529, %v614
    %v616 = vpop.f32.mrb[0].mxu0
    %617 = vmatprep.mubr.f32.mxu0 0.0
    %618 = vmatmul.mubr.f32.gmra.mrb[0].mxu0 %v534
    %v619 = vpop.f32.mrb[0].mxu0
    %v620 = vadd.f32 %v529, %v619
    %v621 = vpop.f32.mrb[0].mxu0
    %622 = vdwg.mxu0
    %v623 = vmax.f32 %v615, 0.0
    %v624 = vmax.f32 %v620, 0.0
    %v625 = vld [vmem:[%s0 + $0x20] sm:$0xff]
    %v626 = vld [vmem:[%s0 + $0x28] sm:$0xff]
    %v627 = vld [vmem:[%s1 + $0xa0] sm:$0xff]
    %v628 = vld [vmem:[%s1 + $0xa8] sm:$0xff]
    %v629 = vld [vmem:[%s1 + $0xb0] sm:$0xff]
    %v630 = vld [vmem:[%s1 + $0xb8] sm:$0xff]
    %v631 = vld [vmem:[%s1 + $0xc0] sm:$0xff]
    %v632 = vld [vmem:[%s1 + $0xc8] sm:$0xff]
    %v633 = vld [vmem:[%s1 + $0xd0] sm:$0xff]
    %v634 = vld [vmem:[%s1 + $0xd8] sm:$0xff]
    %v635 = vld [vmem:[%s1 + $0xe0] sm:$0xff]
    %v636 = vld [vmem:[%s1 + $0xe8] sm:$0xff]
    %v637 = vlaneseq
    %v638 = vshrl.u32 %v637, 7
    %v639 = vsub.s32 6, %v638
    %v640 = vrot.slane %v15, %v639
    %v642 = vsel %vm33, %v625, 0
    %v645 = vsel %vm33, %v626, 0
    %v648 = vsel %vm33, %v627, 0
    %v651 = vsel %vm33, %v628, 0
    %v654 = vsel %vm33, %v629, 0
    %656 = vmatprep.subr.mxu0 0.0
    %657 = vmatpush1.xpose.msra.mxu0 %v648
    %658 = vmatprep.subr.mxu0 0.0
    %659 = vmatpush1.xpose.msra.mxu0 %v651
    %660 = vmatprep.subr.mxu0 0.0
    %661 = vmatpush1.xpose.msra.mxu0 %v654
    %662 = vmatprep.subr.mxu0 0.0
    %663 = vmatpush1.xpose.msra.mxu0 0.0
    %664 = vmatprep.subr.mxu0 0.0
    %665 = vmatpush1.xpose.msra.mxu0 0.0
    %666 = vmatprep.subr.mxu0 0.0
    %667 = vmatpush1.xpose.msra.mxu0 0.0
    %668 = vmatprep.subr.mxu0 0.0
    %669 = vmatpush1.xpose.msra.mxu0 0.0
    %670 = vmatprep.subr.mxu0 0.0
    %671 = vmatpush1.xpose.msra.mxu0 0.0
    %672 = vmatprep.subr.mxu0 0.0
    %673 = vmatpush1.xpose.msra.mxu0 0.0
    %674 = vmatprep.subr.mxu0 0.0
    %675 = vmatpush1.xpose.msra.mxu0 0.0
    %676 = vmatprep.subr.mxu0 0.0
    %677 = vmatpush1.xpose.msra.mxu0 0.0
    %678 = vmatprep.subr.mxu0 0.0
    %679 = vmatpush1.xpose.msra.mxu0 0.0
    %680 = vmatprep.subr.mxu0 0.0
    %681 = vmatpush1.xpose.msra.mxu0 0.0
    %682 = vmatprep.subr.mxu0 0.0
    %683 = vmatpush1.xpose.msra.mxu0 0.0
    %684 = vmatprep.subr.mxu0 0.0
    %685 = vmatpush1.xpose.msra.mxu0 0.0
    %686 = vmatprep.subr.mxu0 0.0
    %687 = vmatpush1.xpose.msra.mxu0 0.0
    %688 = vmatprep.subr.mxu0 0.0
    %689 = vmatpush1.xpose.msra.mxu0 0.0
    %690 = vmatprep.subr.mxu0 0.0
    %691 = vmatpush1.xpose.msra.mxu0 0.0
    %692 = vmatprep.subr.mxu0 0.0
    %693 = vmatpush1.xpose.msra.mxu0 0.0
    %694 = vmatprep.subr.mxu0 0.0
    %695 = vmatpush1.xpose.msra.mxu0 0.0
    %696 = vmatprep.subr.mxu0 0.0
    %697 = vmatpush1.xpose.msra.mxu0 0.0
    %698 = vmatprep.subr.mxu0 0.0
    %699 = vmatpush1.xpose.msra.mxu0 0.0
    %700 = vmatprep.subr.mxu0 0.0
    %701 = vmatpush1.xpose.msra.mxu0 0.0
    %702 = vmatprep.subr.mxu0 0.0
    %703 = vmatpush1.xpose.msra.mxu0 0.0
    %704 = vmatprep.subr.mxu0 0.0
    %705 = vmatpush1.xpose.msra.mxu0 0.0
    %706 = vmatprep.subr.mxu0 0.0
    %707 = vmatpush1.xpose.msra.mxu0 0.0
    %708 = vmatprep.subr.mxu0 0.0
    %709 = vmatpush1.xpose.msra.mxu0 0.0
    %710 = vmatprep.subr.mxu0 0.0
    %711 = vmatpush1.xpose.msra.mxu0 0.0
    %712 = vmatprep.subr.mxu0 0.0
    %713 = vmatpush1.xpose.msra.mxu0 0.0
    %714 = vmatprep.subr.mxu0 0.0
    %715 = vmatpush1.xpose.msra.mxu0 0.0
    %716 = vmatprep.subr.mxu0 0.0
    %717 = vmatpush1.xpose.msra.mxu0 0.0
    %718 = vmatprep.subr.mxu0 0.0
    %719 = vmatpush1.xpose.msra.mxu0 0.0
    %720 = vmatprep.mubr.f32.mxu0 0.0
    %721 = vmatmul.mubr.f32.gmra.mrb[0].mxu0 %v642
    %v722 = vpop.f32.mrb[0].mxu0
    %v723 = vadd.f32 %v640, %v722
    %v724 = vpop.f32.mrb[0].mxu0
    %725 = vmatprep.mubr.f32.mxu0 0.0
    %726 = vmatmul.mubr.f32.gmra.mrb[0].mxu0 %v645
    %v727 = vpop.f32.mrb[0].mxu0
    %v728 = vadd.f32 %v640, %v727
    %v729 = vpop.f32.mrb[0].mxu0
    %730 = vdwg.mxu0
    %v731 = vmax.f32 %v723, 0.0
    %v732 = vmax.f32 %v728, 0.0
    %v733 = vlaneseq
    %v734 = vshrl.u32 %v733, 7
    %v735 = vsub.s32 7, %v734
    %v736 = vrot.slane %v15, %v735
    %v738 = vsel %vm130, %v731, 0
    %v741 = vsel %vm130, %v732, 0
    %v744 = vsel %vm130, %v630, 0
    %v747 = vsel %vm130, %v631, 0
    %v750 = vsel %vm130, %v632, 0
    %752 = vmatprep.subr.mxu0 0.0
    %753 = vmatpush1.xpose.msra.mxu0 %v744
    %754 = vmatprep.subr.mxu0 0.0
    %755 = vmatpush1.xpose.msra.mxu0 %v747
    %756 = vmatprep.subr.mxu0 0.0
    %757 = vmatpush1.xpose.msra.mxu0 %v750
    %758 = vmatprep.subr.mxu0 0.0
    %759 = vmatpush1.xpose.msra.mxu0 0.0
    %760 = vmatprep.subr.mxu0 0.0
    %761 = vmatpush1.xpose.msra.mxu0 0.0
    %762 = vmatprep.subr.mxu0 0.0
    %763 = vmatpush1.xpose.msra.mxu0 0.0
    %764 = vmatprep.subr.mxu0 0.0
    %765 = vmatpush1.xpose.msra.mxu0 0.0
    %766 = vmatprep.subr.mxu0 0.0
    %767 = vmatpush1.xpose.msra.mxu0 0.0
    %768 = vmatprep.subr.mxu0 0.0
    %769 = vmatpush1.xpose.msra.mxu0 0.0
    %770 = vmatprep.subr.mxu0 0.0
    %771 = vmatpush1.xpose.msra.mxu0 0.0
    %772 = vmatprep.subr.mxu0 0.0
    %773 = vmatpush1.xpose.msra.mxu0 0.0
    %774 = vmatprep.subr.mxu0 0.0
    %775 = vmatpush1.xpose.msra.mxu0 0.0
    %776 = vmatprep.subr.mxu0 0.0
    %777 = vmatpush1.xpose.msra.mxu0 0.0
    %778 = vmatprep.subr.mxu0 0.0
    %779 = vmatpush1.xpose.msra.mxu0 0.0
    %780 = vmatprep.subr.mxu0 0.0
    %781 = vmatpush1.xpose.msra.mxu0 0.0
    %782 = vmatprep.subr.mxu0 0.0
    %783 = vmatpush1.xpose.msra.mxu0 0.0
    %784 = vmatprep.subr.mxu0 0.0
    %785 = vmatpush1.xpose.msra.mxu0 0.0
    %786 = vmatprep.subr.mxu0 0.0
    %787 = vmatpush1.xpose.msra.mxu0 0.0
    %788 = vmatprep.subr.mxu0 0.0
    %789 = vmatpush1.xpose.msra.mxu0 0.0
    %790 = vmatprep.subr.mxu0 0.0
    %791 = vmatpush1.xpose.msra.mxu0 0.0
    %792 = vmatprep.subr.mxu0 0.0
    %793 = vmatpush1.xpose.msra.mxu0 0.0
    %794 = vmatprep.subr.mxu0 0.0
    %795 = vmatpush1.xpose.msra.mxu0 0.0
    %796 = vmatprep.subr.mxu0 0.0
    %797 = vmatpush1.xpose.msra.mxu0 0.0
    %798 = vmatprep.subr.mxu0 0.0
    %799 = vmatpush1.xpose.msra.mxu0 0.0
    %800 = vmatprep.subr.mxu0 0.0
    %801 = vmatpush1.xpose.msra.mxu0 0.0
    %802 = vmatprep.subr.mxu0 0.0
    %803 = vmatpush1.xpose.msra.mxu0 0.0
    %804 = vmatprep.subr.mxu0 0.0
    %805 = vmatpush1.xpose.msra.mxu0 0.0
    %806 = vmatprep.subr.mxu0 0.0
    %807 = vmatpush1.xpose.msra.mxu0 0.0
    %808 = vmatprep.subr.mxu0 0.0
    %809 = vmatpush1.xpose.msra.mxu0 0.0
    %810 = vmatprep.subr.mxu0 0.0
    %811 = vmatpush1.xpose.msra.mxu0 0.0
    %812 = vmatprep.subr.mxu0 0.0
    %813 = vmatpush1.xpose.msra.mxu0 0.0
    %814 = vmatprep.subr.mxu0 0.0
    %815 = vmatpush1.xpose.msra.mxu0 0.0
    %816 = vmatprep.mubr.f32.mxu0 0.0
    %817 = vmatmul.mubr.f32.gmra.mrb[0].mxu0 %v738
    %v818 = vpop.f32.mrb[0].mxu0
    %v819 = vadd.f32 %v736, %v818
    %v820 = vpop.f32.mrb[0].mxu0
    %821 = vmatprep.mubr.f32.mxu0 0.0
    %822 = vmatmul.mubr.f32.gmra.mrb[0].mxu0 %v741
    %v823 = vpop.f32.mrb[0].mxu0
    %v824 = vadd.f32 %v736, %v823
    %v825 = vpop.f32.mrb[0].mxu0
    %826 = vdwg.mxu0
    %v827 = vmax.f32 %v819, 0.0
    %v828 = vmax.f32 %v824, 0.0
    %v829 = vlaneseq
    %v830 = vshrl.u32 %v829, 7
    %v831 = vsub.s32 0, %v830
    %v832 = vrot.slane %v16, %v831
    %v834 = vsel %vm130, %v827, 0
    %v837 = vsel %vm130, %v828, 0
    %v840 = vsel %vm130, %v633, 0
    %v843 = vsel %vm130, %v634, 0
    %v846 = vsel %vm130, %v635, 0
    %v849 = vsel %vm130, %v636, 0
    %851 = vmatprep.subr.mxu0 0.0
    %852 = vmatpush1.xpose.msra.mxu0 %v840
    %853 = vmatprep.subr.mxu0 0.0
    %854 = vmatpush1.xpose.msra.mxu0 %v843
    %855 = vmatprep.subr.mxu0 0.0
    %856 = vmatpush1.xpose.msra.mxu0 %v846
    %857 = vmatprep.subr.mxu0 0.0
    %858 = vmatpush1.xpose.msra.mxu0 %v849
    %859 = vmatprep.subr.mxu0 0.0
    %860 = vmatpush1.xpose.msra.mxu0 0.0
    %861 = vmatprep.subr.mxu0 0.0
    %862 = vmatpush1.xpose.msra.mxu0 0.0
    %863 = vmatprep.subr.mxu0 0.0
    %864 = vmatpush1.xpose.msra.mxu0 0.0
    %865 = vmatprep.subr.mxu0 0.0
    %866 = vmatpush1.xpose.msra.mxu0 0.0
    %867 = vmatprep.subr.mxu0 0.0
    %868 = vmatpush1.xpose.msra.mxu0 0.0
    %869 = vmatprep.subr.mxu0 0.0
    %870 = vmatpush1.xpose.msra.mxu0 0.0
    %871 = vmatprep.subr.mxu0 0.0
    %872 = vmatpush1.xpose.msra.mxu0 0.0
    %873 = vmatprep.subr.mxu0 0.0
    %874 = vmatpush1.xpose.msra.mxu0 0.0
    %875 = vmatprep.subr.mxu0 0.0
    %876 = vmatpush1.xpose.msra.mxu0 0.0
    %877 = vmatprep.subr.mxu0 0.0
    %878 = vmatpush1.xpose.msra.mxu0 0.0
    %879 = vmatprep.subr.mxu0 0.0
    %880 = vmatpush1.xpose.msra.mxu0 0.0
    %881 = vmatprep.subr.mxu0 0.0
    %882 = vmatpush1.xpose.msra.mxu0 0.0
    %883 = vmatprep.subr.mxu0 0.0
    %884 = vmatpush1.xpose.msra.mxu0 0.0
    %885 = vmatprep.subr.mxu0 0.0
    %886 = vmatpush1.xpose.msra.mxu0 0.0
    %887 = vmatprep.subr.mxu0 0.0
    %888 = vmatpush1.xpose.msra.mxu0 0.0
    %889 = vmatprep.subr.mxu0 0.0
    %890 = vmatpush1.xpose.msra.mxu0 0.0
    %891 = vmatprep.subr.mxu0 0.0
    %892 = vmatpush1.xpose.msra.mxu0 0.0
    %893 = vmatprep.subr.mxu0 0.0
    %894 = vmatpush1.xpose.msra.mxu0 0.0
    %895 = vmatprep.subr.mxu0 0.0
    %896 = vmatpush1.xpose.msra.mxu0 0.0
    %897 = vmatprep.subr.mxu0 0.0
    %898 = vmatpush1.xpose.msra.mxu0 0.0
    %899 = vmatprep.subr.mxu0 0.0
    %900 = vmatpush1.xpose.msra.mxu0 0.0
    %901 = vmatprep.subr.mxu0 0.0
    %902 = vmatpush1.xpose.msra.mxu0 0.0
    %903 = vmatprep.subr.mxu0 0.0
    %904 = vmatpush1.xpose.msra.mxu0 0.0
    %905 = vmatprep.subr.mxu0 0.0
    %906 = vmatpush1.xpose.msra.mxu0 0.0
    %907 = vmatprep.subr.mxu0 0.0
    %908 = vmatpush1.xpose.msra.mxu0 0.0
    %909 = vmatprep.subr.mxu0 0.0
    %910 = vmatpush1.xpose.msra.mxu0 0.0
    %911 = vmatprep.subr.mxu0 0.0
    %912 = vmatpush1.xpose.msra.mxu0 0.0
    %913 = vmatprep.subr.mxu0 0.0
    %914 = vmatpush1.xpose.msra.mxu0 0.0
    %915 = vmatprep.mubr.f32.mxu0 0.0
    %916 = vmatmul.mubr.f32.gmra.mrb[0].mxu0 %v834
    %v917 = vpop.f32.mrb[0].mxu0
    %v918 = vadd.f32 %v832, %v917
    %v919 = vpop.f32.mrb[0].mxu0
    %920 = vmatprep.mubr.f32.mxu0 0.0
    %921 = vmatmul.mubr.f32.gmra.mrb[0].mxu0 %v837
    %v922 = vpop.f32.mrb[0].mxu0
    %v923 = vadd.f32 %v832, %v922
    %v924 = vpop.f32.mrb[0].mxu0
    %925 = vdwg.mxu0
    %v926 = vsel %vm33, %v918, -inf
    %927 = vmax.xlane.f32.xlu0 %v926
    %v928 = vpop.xlane.xlu0 %927
    %v929 = vsel %vm33, %v923, -inf
    %930 = vmax.xlane.f32.xlu0 %v929
    %v931 = vpop.xlane.xlu0 %930
    %v932 = vsub.f32 %v918, %v928
    %v933 = vsub.f32 %v923, %v931
    %v934 = vmul.f32 %v932, 1.442695
    %v935 = vpow.pop %v934
    %v936 = vmul.f32 %v933, 1.442695
    %v937 = vpow.pop %v936
    %v938 = vsel %vm33, %v935, 0.0
    %939 = vadd.xlane.f32.xlu0 %v938
    %v940 = vpop.xlane.xlu0 %939
    %v941 = vsel %vm33, %v937, 0.0
    %942 = vadd.xlane.f32.xlu0 %v941
    %v943 = vpop.xlane.xlu0 %942
    %v944 = vrcp.pop %v940
    %v945 = vmul.f32 %v935, %v944
    %v946 = vrcp.pop %v943
    %v947 = vmul.f32 %v937, %v946
    %v948 = vld [vmem:[%s1 + $0xf0] sm:$0xff]
    %v949 = vld [vmem:[%s1 + $0xf8] sm:$0xff]
    %v950 = vld [vmem:[%s1 + $0x100] sm:$0xff]
    %v951 = vld [vmem:[%s1 + $0x108] sm:$0xff]
    %v952 = vld [vmem:[%s1 + $0x110] sm:$0xff]
    %v953 = vld [vmem:[%s1 + $0x118] sm:$0xff]
    %v954 = vld [vmem:[%s1 + $0x120] sm:$0xff]
    %v955 = vld [vmem:[%s1 + $0x128] sm:$0xff]
    %v956 = vld [vmem:[%s1 + $0x130] sm:$0xff]
    %v957 = vld [vmem:[%s1 + $0x138] sm:$0xff]
    %v958 = vld [vmem:[%s1 + $0x140] sm:$0xff]
    %v959 = vld [vmem:[%s1 + $0x148] sm:$0xff]
    %v960 = vld [vmem:[%s1 + $0x150] sm:$0xff]
    %v961 = vld [vmem:[%s1 + $0x158] sm:$0xff]
    %v962 = vld [vmem:[%s1 + $0x160] sm:$0xff]
    %v963 = vld [vmem:[%s1 + $0x168] sm:$0xff]
    %v964 = vld [vmem:[%s1 + $0x170] sm:$0xff]
    %v965 = vld [vmem:[%s1 + $0x178] sm:$0xff]
    %v966 = vld [vmem:[%s1 + $0x180] sm:$0xff]
    %v967 = vld [vmem:[%s1 + $0x188] sm:$0xff]
    %v968 = vld [vmem:[%s1 + $0x190] sm:$0xff]
    %v969 = vld [vmem:[%s1 + $0x198] sm:$0xff]
    %v970 = vld [vmem:[%s1 + $0x1a0] sm:$0xff]
    %v971 = vld [vmem:[%s1 + $0x1a8] sm:$0xff]
    %v972 = vld [vmem:[%s1 + $0x1b0] sm:$0xff]
    %v973 = vld [vmem:[%s1 + $0x1b8] sm:$0xff]
    %v974 = vld [vmem:[%s1 + $0x1c0] sm:$0xff]
    %v975 = vld [vmem:[%s1 + $0x1c8] sm:$0xff]
    %v976 = vlaneseq
    %v977 = vshrl.u32 %v976, 7
    %v978 = vsub.s32 1, %v977
    %v979 = vrot.slane %v16, %v978
    %v981 = vsel %vm33, %v945, 0
    %v984 = vsel %vm33, %v947, 0
    %v987 = vsel %vm33, %v948, 0
    %v990 = vsel %vm33, %v949, 0
    %v993 = vsel %vm33, %v950, 0
    %v996 = vsel %vm33, %v951, 0
    %998 = vmatprep.subr.mxu0 0.0
    %999 = vmatpush1.xpose.msra.mxu0 %v987
    %1000 = vmatprep.subr.mxu0 0.0
    %1001 = vmatpush1.xpose.msra.mxu0 %v990
    %1002 = vmatprep.subr.mxu0 0.0
    %1003 = vmatpush1.xpose.msra.mxu0 %v993
    %1004 = vmatprep.subr.mxu0 0.0
    %1005 = vmatpush1.xpose.msra.mxu0 %v996
    %1006 = vmatprep.subr.mxu0 0.0
    %1007 = vmatpush1.xpose.msra.mxu0 0.0
    %1008 = vmatprep.subr.mxu0 0.0
    %1009 = vmatpush1.xpose.msra.mxu0 0.0
    %1010 = vmatprep.subr.mxu0 0.0
    %1011 = vmatpush1.xpose.msra.mxu0 0.0
    %1012 = vmatprep.subr.mxu0 0.0
    %1013 = vmatpush1.xpose.msra.mxu0 0.0
    %1014 = vmatprep.subr.mxu0 0.0
    %1015 = vmatpush1.xpose.msra.mxu0 0.0
    %1016 = vmatprep.subr.mxu0 0.0
    %1017 = vmatpush1.xpose.msra.mxu0 0.0
    %1018 = vmatprep.subr.mxu0 0.0
    %1019 = vmatpush1.xpose.msra.mxu0 0.0
    %1020 = vmatprep.subr.mxu0 0.0
    %1021 = vmatpush1.xpose.msra.mxu0 0.0
    %1022 = vmatprep.subr.mxu0 0.0
    %1023 = vmatpush1.xpose.msra.mxu0 0.0
    %1024 = vmatprep.subr.mxu0 0.0
    %1025 = vmatpush1.xpose.msra.mxu0 0.0
    %1026 = vmatprep.subr.mxu0 0.0
    %1027 = vmatpush1.xpose.msra.mxu0 0.0
    %1028 = vmatprep.subr.mxu0 0.0
    %1029 = vmatpush1.xpose.msra.mxu0 0.0
    %1030 = vmatprep.subr.mxu0 0.0
    %1031 = vmatpush1.xpose.msra.mxu0 0.0
    %1032 = vmatprep.subr.mxu0 0.0
    %1033 = vmatpush1.xpose.msra.mxu0 0.0
    %1034 = vmatprep.subr.mxu0 0.0
    %1035 = vmatpush1.xpose.msra.mxu0 0.0
    %1036 = vmatprep.subr.mxu0 0.0
    %1037 = vmatpush1.xpose.msra.mxu0 0.0
    %1038 = vmatprep.subr.mxu0 0.0
    %1039 = vmatpush1.xpose.msra.mxu0 0.0
    %1040 = vmatprep.subr.mxu0 0.0
    %1041 = vmatpush1.xpose.msra.mxu0 0.0
    %1042 = vmatprep.subr.mxu0 0.0
    %1043 = vmatpush1.xpose.msra.mxu0 0.0
    %1044 = vmatprep.subr.mxu0 0.0
    %1045 = vmatpush1.xpose.msra.mxu0 0.0
    %1046 = vmatprep.subr.mxu0 0.0
    %1047 = vmatpush1.xpose.msra.mxu0 0.0
    %1048 = vmatprep.subr.mxu0 0.0
    %1049 = vmatpush1.xpose.msra.mxu0 0.0
    %1050 = vmatprep.subr.mxu0 0.0
    %1051 = vmatpush1.xpose.msra.mxu0 0.0
    %1052 = vmatprep.subr.mxu0 0.0
    %1053 = vmatpush1.xpose.msra.mxu0 0.0
    %1054 = vmatprep.subr.mxu0 0.0
    %1055 = vmatpush1.xpose.msra.mxu0 0.0
    %1056 = vmatprep.subr.mxu0 0.0
    %1057 = vmatpush1.xpose.msra.mxu0 0.0
    %1058 = vmatprep.subr.mxu0 0.0
    %1059 = vmatpush1.xpose.msra.mxu0 0.0
    %1060 = vmatprep.subr.mxu0 0.0
    %1061 = vmatpush1.xpose.msra.mxu0 0.0
    %1062 = vmatprep.mubr.f32.mxu0 0.0
    %1063 = vmatmul.mubr.f32.gmra.mrb[0].mxu0 %v981
    %v1064 = vpop.f32.mrb[0].mxu0
    %v1065 = vadd.f32 %v979, %v1064
    %v1066 = vpop.f32.mrb[0].mxu0
    %1067 = vmatprep.mubr.f32.mxu0 0.0
    %1068 = vmatmul.mubr.f32.gmra.mrb[0].mxu0 %v984
    %v1069 = vpop.f32.mrb[0].mxu0
    %v1070 = vadd.f32 %v979, %v1069
    %v1071 = vpop.f32.mrb[0].mxu0
    %1072 = vdwg.mxu0
    %1074 = vrot.lane.b32.xlu0 %v979, 96
    %v1075 = vpop.permute.xlu0 %1074
    %v1078 = vsel %vm33, %v320, 0
    %v1081 = vsel %vm33, %v321, 0
    %v1084 = vsel %vm33, %v952, 0
    %v1087 = vsel %vm33, %v953, 0
    %v1090 = vsel %vm33, %v954, 0
    %v1093 = vsel %vm33, %v955, 0
    %1095 = vmatprep.subr.mxu0 0.0
    %1096 = vmatpush1.xpose.msra.mxu0 %v1084
    %1097 = vmatprep.subr.mxu0 0.0
    %1098 = vmatpush1.xpose.msra.mxu0 %v1087
    %1099 = vmatprep.subr.mxu0 0.0
    %1100 = vmatpush1.xpose.msra.mxu0 %v1090
    %1101 = vmatprep.subr.mxu0 0.0
    %1102 = vmatpush1.xpose.msra.mxu0 %v1093
    %1103 = vmatprep.subr.mxu0 0.0
    %1104 = vmatpush1.xpose.msra.mxu0 0.0
    %1105 = vmatprep.subr.mxu0 0.0
    %1106 = vmatpush1.xpose.msra.mxu0 0.0
    %1107 = vmatprep.subr.mxu0 0.0
    %1108 = vmatpush1.xpose.msra.mxu0 0.0
    %1109 = vmatprep.subr.mxu0 0.0
    %1110 = vmatpush1.xpose.msra.mxu0 0.0
    %1111 = vmatprep.subr.mxu0 0.0
    %1112 = vmatpush1.xpose.msra.mxu0 0.0
    %1113 = vmatprep.subr.mxu0 0.0
    %1114 = vmatpush1.xpose.msra.mxu0 0.0
    %1115 = vmatprep.subr.mxu0 0.0
    %1116 = vmatpush1.xpose.msra.mxu0 0.0
    %1117 = vmatprep.subr.mxu0 0.0
    %1118 = vmatpush1.xpose.msra.mxu0 0.0
    %1119 = vmatprep.subr.mxu0 0.0
    %1120 = vmatpush1.xpose.msra.mxu0 0.0
    %1121 = vmatprep.subr.mxu0 0.0
    %1122 = vmatpush1.xpose.msra.mxu0 0.0
    %1123 = vmatprep.subr.mxu0 0.0
    %1124 = vmatpush1.xpose.msra.mxu0 0.0
    %1125 = vmatprep.subr.mxu0 0.0
    %1126 = vmatpush1.xpose.msra.mxu0 0.0
    %1127 = vmatprep.subr.mxu0 0.0
    %1128 = vmatpush1.xpose.msra.mxu0 0.0
    %1129 = vmatprep.subr.mxu0 0.0
    %1130 = vmatpush1.xpose.msra.mxu0 0.0
    %1131 = vmatprep.subr.mxu0 0.0
    %1132 = vmatpush1.xpose.msra.mxu0 0.0
    %1133 = vmatprep.subr.mxu0 0.0
    %1134 = vmatpush1.xpose.msra.mxu0 0.0
    %1135 = vmatprep.subr.mxu0 0.0
    %1136 = vmatpush1.xpose.msra.mxu0 0.0
    %1137 = vmatprep.subr.mxu0 0.0
    %1138 = vmatpush1.xpose.msra.mxu0 0.0
    %1139 = vmatprep.subr.mxu0 0.0
    %1140 = vmatpush1.xpose.msra.mxu0 0.0
    %1141 = vmatprep.subr.mxu0 0.0
    %1142 = vmatpush1.xpose.msra.mxu0 0.0
    %1143 = vmatprep.subr.mxu0 0.0
    %1144 = vmatpush1.xpose.msra.mxu0 0.0
    %1145 = vmatprep.subr.mxu0 0.0
    %1146 = vmatpush1.xpose.msra.mxu0 0.0
    %1147 = vmatprep.subr.mxu0 0.0
    %1148 = vmatpush1.xpose.msra.mxu0 0.0
    %1149 = vmatprep.subr.mxu0 0.0
    %1150 = vmatpush1.xpose.msra.mxu0 0.0
    %1151 = vmatprep.subr.mxu0 0.0
    %1152 = vmatpush1.xpose.msra.mxu0 0.0
    %1153 = vmatprep.subr.mxu0 0.0
    %1154 = vmatpush1.xpose.msra.mxu0 0.0
    %1155 = vmatprep.subr.mxu0 0.0
    %1156 = vmatpush1.xpose.msra.mxu0 0.0
    %1157 = vmatprep.subr.mxu0 0.0
    %1158 = vmatpush1.xpose.msra.mxu0 0.0
    %1159 = vmatprep.mubr.f32.mxu0 0.0
    %1160 = vmatmul.mubr.f32.gmra.mrb[0].mxu0 %v1078
    %v1161 = vpop.f32.mrb[0].mxu0
    %v1162 = vadd.f32 %v1075, %v1161
    %v1163 = vpop.f32.mrb[0].mxu0
    %1164 = vmatprep.mubr.f32.mxu0 0.0
    %1165 = vmatmul.mubr.f32.gmra.mrb[0].mxu0 %v1081
    %v1166 = vpop.f32.mrb[0].mxu0
    %v1167 = vadd.f32 %v1075, %v1166
    %v1168 = vpop.f32.mrb[0].mxu0
    %1169 = vdwg.mxu0
    %1170 = vrot.lane.b32.xlu0 %v979, 64
    %v1171 = vpop.permute.xlu0 %1170
    %v1174 = vsel %vm33, %v623, 0
    %v1177 = vsel %vm33, %v624, 0
    %v1180 = vsel %vm33, %v956, 0
    %v1183 = vsel %vm33, %v957, 0
    %v1186 = vsel %vm33, %v958, 0
    %v1189 = vsel %vm33, %v959, 0
    %1191 = vmatprep.subr.mxu0 0.0
    %1192 = vmatpush1.xpose.msra.mxu0 %v1180
    %1193 = vmatprep.subr.mxu0 0.0
    %1194 = vmatpush1.xpose.msra.mxu0 %v1183
    %1195 = vmatprep.subr.mxu0 0.0
    %1196 = vmatpush1.xpose.msra.mxu0 %v1186
    %1197 = vmatprep.subr.mxu0 0.0
    %1198 = vmatpush1.xpose.msra.mxu0 %v1189
    %1199 = vmatprep.subr.mxu0 0.0
    %1200 = vmatpush1.xpose.msra.mxu0 0.0
    %1201 = vmatprep.subr.mxu0 0.0
    %1202 = vmatpush1.xpose.msra.mxu0 0.0
    %1203 = vmatprep.subr.mxu0 0.0
    %1204 = vmatpush1.xpose.msra.mxu0 0.0
    %1205 = vmatprep.subr.mxu0 0.0
    %1206 = vmatpush1.xpose.msra.mxu0 0.0
    %1207 = vmatprep.subr.mxu0 0.0
    %1208 = vmatpush1.xpose.msra.mxu0 0.0
    %1209 = vmatprep.subr.mxu0 0.0
    %1210 = vmatpush1.xpose.msra.mxu0 0.0
    %1211 = vmatprep.subr.mxu0 0.0
    %1212 = vmatpush1.xpose.msra.mxu0 0.0
    %1213 = vmatprep.subr.mxu0 0.0
    %1214 = vmatpush1.xpose.msra.mxu0 0.0
    %1215 = vmatprep.subr.mxu0 0.0
    %1216 = vmatpush1.xpose.msra.mxu0 0.0
    %1217 = vmatprep.subr.mxu0 0.0
    %1218 = vmatpush1.xpose.msra.mxu0 0.0
    %1219 = vmatprep.subr.mxu0 0.0
    %1220 = vmatpush1.xpose.msra.mxu0 0.0
    %1221 = vmatprep.subr.mxu0 0.0
    %1222 = vmatpush1.xpose.msra.mxu0 0.0
    %1223 = vmatprep.subr.mxu0 0.0
    %1224 = vmatpush1.xpose.msra.mxu0 0.0
    %1225 = vmatprep.subr.mxu0 0.0
    %1226 = vmatpush1.xpose.msra.mxu0 0.0
    %1227 = vmatprep.subr.mxu0 0.0
    %1228 = vmatpush1.xpose.msra.mxu0 0.0
    %1229 = vmatprep.subr.mxu0 0.0
    %1230 = vmatpush1.xpose.msra.mxu0 0.0
    %1231 = vmatprep.subr.mxu0 0.0
    %1232 = vmatpush1.xpose.msra.mxu0 0.0
    %1233 = vmatprep.subr.mxu0 0.0
    %1234 = vmatpush1.xpose.msra.mxu0 0.0
    %1235 = vmatprep.subr.mxu0 0.0
    %1236 = vmatpush1.xpose.msra.mxu0 0.0
    %1237 = vmatprep.subr.mxu0 0.0
    %1238 = vmatpush1.xpose.msra.mxu0 0.0
    %1239 = vmatprep.subr.mxu0 0.0
    %1240 = vmatpush1.xpose.msra.mxu0 0.0
    %1241 = vmatprep.subr.mxu0 0.0
    %1242 = vmatpush1.xpose.msra.mxu0 0.0
    %1243 = vmatprep.subr.mxu0 0.0
    %1244 = vmatpush1.xpose.msra.mxu0 0.0
    %1245 = vmatprep.subr.mxu0 0.0
    %1246 = vmatpush1.xpose.msra.mxu0 0.0
    %1247 = vmatprep.subr.mxu0 0.0
    %1248 = vmatpush1.xpose.msra.mxu0 0.0
    %1249 = vmatprep.subr.mxu0 0.0
    %1250 = vmatpush1.xpose.msra.mxu0 0.0
    %1251 = vmatprep.subr.mxu0 0.0
    %1252 = vmatpush1.xpose.msra.mxu0 0.0
    %1253 = vmatprep.subr.mxu0 0.0
    %1254 = vmatpush1.xpose.msra.mxu0 0.0
    %1255 = vmatprep.mubr.f32.mxu0 0.0
    %1256 = vmatmul.mubr.f32.gmra.mrb[0].mxu0 %v1174
    %v1257 = vpop.f32.mrb[0].mxu0
    %v1258 = vadd.f32 %v1171, %v1257
    %v1259 = vpop.f32.mrb[0].mxu0
    %1260 = vmatprep.mubr.f32.mxu0 0.0
    %1261 = vmatmul.mubr.f32.gmra.mrb[0].mxu0 %v1177
    %v1262 = vpop.f32.mrb[0].mxu0
    %v1263 = vadd.f32 %v1171, %v1262
    %v1264 = vpop.f32.mrb[0].mxu0
    %1265 = vdwg.mxu0
    %v1266 = vlaneseq
    %v1267 = vshrl.u32 %v1266, 7
    %v1268 = vadd.s32 %v1267, 8
    %v1269 = vlaneseq
    %v1270 = vand.u32 %v1269, 127
    %vm1271 = vcmp.ge.s32.totalorder %v1267, 0
    %vm1272 = vcmp.ge.s32.totalorder %v1268, 0
    %vm1273 = vcmp.lt.s32.totalorder %v1267, 6
    %vm1274 = vcmp.lt.s32.totalorder %v1268, 6
    %vm1275 = vmand %vm1271, %vm1273
    %vm1276 = vmand %vm1272, %vm1274
    %vm1277 = vcmp.ge.s32.totalorder %v1270, 0
    %vm1278 = vcmp.lt.s32.totalorder %v1270, 8
    %vm1279 = vmand %vm1277, %vm1278
    %vm1280 = vmand %vm1275, %vm1279
    %vm1281 = vmand %vm1276, %vm1279
    %vm1282 = vcmp.ge.s32.totalorder %v1267, 6
    %vm1283 = vcmp.ge.s32.totalorder %v1268, 6
    %vm1284 = vcmp.lt.s32.totalorder %v1267, 12
    %vm1285 = vcmp.lt.s32.totalorder %v1268, 12
    %vm1286 = vmand %vm1282, %vm1284
    %vm1287 = vmand %vm1283, %vm1285
    %vm1288 = vcmp.ge.s32.totalorder %v1270, 8
    %vm1289 = vcmp.lt.s32.totalorder %v1270, 16
    %vm1290 = vmand %vm1288, %vm1289
    %vm1291 = vmand %vm1286, %vm1290
    %vm1292 = vmand %vm1287, %vm1290
    %vm1293 = vmor %vm1280, %vm1291
    %vm1294 = vmor %vm1281, %vm1292
    %vm1295 = vcmask 64512
    %v1297 = vsel %vm1295, %v1065, 0
    %v1300 = vsel %vm1295, %v1070, 0
    %v1303 = vsel %vm1295, %v1162, 0
    %v1306 = vsel %vm1295, %v1167, 0
    %1308 = vmatprep.subr.mxu0 0.0
    %1309 = vmatpush1.xpose.msra.mxu0 %v1303
    %1310 = vmatprep.subr.mxu0 0.0
    %1311 = vmatpush1.xpose.msra.mxu0 %v1306
    %1312 = vmatprep.subr.mxu0 0.0
    %1313 = vmatpush1.xpose.msra.mxu0 0.0
    %1314 = vmatprep.subr.mxu0 0.0
    %1315 = vmatpush1.xpose.msra.mxu0 0.0
    %1316 = vmatprep.subr.mxu0 0.0
    %1317 = vmatpush1.xpose.msra.mxu0 0.0
    %1318 = vmatprep.subr.mxu0 0.0
    %1319 = vmatpush1.xpose.msra.mxu0 0.0
    %1320 = vmatprep.subr.mxu0 0.0
    %1321 = vmatpush1.xpose.msra.mxu0 0.0
    %1322 = vmatprep.subr.mxu0 0.0
    %1323 = vmatpush1.xpose.msra.mxu0 0.0
    %1324 = vmatprep.subr.mxu0 0.0
    %1325 = vmatpush1.xpose.msra.mxu0 0.0
    %1326 = vmatprep.subr.mxu0 0.0
    %1327 = vmatpush1.xpose.msra.mxu0 0.0
    %1328 = vmatprep.subr.mxu0 0.0
    %1329 = vmatpush1.xpose.msra.mxu0 0.0
    %1330 = vmatprep.subr.mxu0 0.0
    %1331 = vmatpush1.xpose.msra.mxu0 0.0
    %1332 = vmatprep.subr.mxu0 0.0
    %1333 = vmatpush1.xpose.msra.mxu0 0.0
    %1334 = vmatprep.subr.mxu0 0.0
    %1335 = vmatpush1.xpose.msra.mxu0 0.0
    %1336 = vmatprep.subr.mxu0 0.0
    %1337 = vmatpush1.xpose.msra.mxu0 0.0
    %1338 = vmatprep.subr.mxu0 0.0
    %1339 = vmatpush1.xpose.msra.mxu0 0.0
    %1340 = vmatprep.subr.mxu0 0.0
    %1341 = vmatpush1.xpose.msra.mxu0 0.0
    %1342 = vmatprep.subr.mxu0 0.0
    %1343 = vmatpush1.xpose.msra.mxu0 0.0
    %1344 = vmatprep.subr.mxu0 0.0
    %1345 = vmatpush1.xpose.msra.mxu0 0.0
    %1346 = vmatprep.subr.mxu0 0.0
    %1347 = vmatpush1.xpose.msra.mxu0 0.0
    %1348 = vmatprep.subr.mxu0 0.0
    %1349 = vmatpush1.xpose.msra.mxu0 0.0
    %1350 = vmatprep.subr.mxu0 0.0
    %1351 = vmatpush1.xpose.msra.mxu0 0.0
    %1352 = vmatprep.subr.mxu0 0.0
    %1353 = vmatpush1.xpose.msra.mxu0 0.0
    %1354 = vmatprep.subr.mxu0 0.0
    %1355 = vmatpush1.xpose.msra.mxu0 0.0
    %1356 = vmatprep.subr.mxu0 0.0
    %1357 = vmatpush1.xpose.msra.mxu0 0.0
    %1358 = vmatprep.subr.mxu0 0.0
    %1359 = vmatpush1.xpose.msra.mxu0 0.0
    %1360 = vmatprep.subr.mxu0 0.0
    %1361 = vmatpush1.xpose.msra.mxu0 0.0
    %1362 = vmatprep.subr.mxu0 0.0
    %1363 = vmatpush1.xpose.msra.mxu0 0.0
    %1364 = vmatprep.subr.mxu0 0.0
    %1365 = vmatpush1.xpose.msra.mxu0 0.0
    %1366 = vmatprep.subr.mxu0 0.0
    %1367 = vmatpush1.xpose.msra.mxu0 0.0
    %1368 = vmatprep.subr.mxu0 0.0
    %1369 = vmatpush1.xpose.msra.mxu0 0.0
    %1370 = vmatprep.subr.mxu0 0.0
    %1371 = vmatpush1.xpose.msra.mxu0 0.0
    %1372 = vmatprep.mubr.f32.mxu0 0.0
    %1373 = vmatmul.mubr.f32.gmra.mrb[0].mxu0 %v1297
    %v1374 = vpop.f32.mrb[0].mxu0
    %v1375 = vadd.f32 0.0, %v1374
    %v1376 = vpop.f32.mrb[0].mxu0
    %1377 = vmatprep.mubr.f32.mxu0 0.0
    %1378 = vmatmul.mubr.f32.gmra.mrb[0].mxu0 %v1300
    %v1379 = vpop.f32.mrb[0].mxu0
    %v1380 = vadd.f32 0.0, %v1379
    %v1381 = vpop.f32.mrb[0].mxu0
    %1382 = vdwg.mxu0
    %v1383 = vsel %vm1293, %v1375, -1e+30
    %v1384 = vsel %vm1294, %v1380, -1e+30
    %vm1385 = vcmask 130048
    %v1386 = vsel %vm1385, %v1383, -inf
    %1387 = vmax.xlane.f32.xlu0 %v1386
    %v1388 = vpop.xlane.xlu0 %1387
    %v1389 = vsel %vm1385, %v1384, -inf
    %1390 = vmax.xlane.f32.xlu0 %v1389
    %v1391 = vpop.xlane.xlu0 %1390
    %v1392 = vsub.f32 %v1383, %v1388
    %v1393 = vsub.f32 %v1384, %v1391
    %v1394 = vmul.f32 %v1392, 1.442695
    %v1395 = vpow.pop %v1394
    %v1396 = vmul.f32 %v1393, 1.442695
    %v1397 = vpow.pop %v1396
    %v1398 = vsel %vm1385, %v1395, 0.0
    %1399 = vadd.xlane.f32.xlu0 %v1398
    %v1400 = vpop.xlane.xlu0 %1399
    %v1401 = vsel %vm1385, %v1397, 0.0
    %1402 = vadd.xlane.f32.xlu0 %v1401
    %v1403 = vpop.xlane.xlu0 %1402
    %v1404 = vrcp.pop %v1400
    %v1405 = vmul.f32 %v1395, %v1404
    %v1406 = vrcp.pop %v1403
    %v1407 = vmul.f32 %v1397, %v1406
    %v1409 = vsel %vm1385, %v1405, 0
    %v1412 = vsel %vm1385, %v1407, 0
    %1414 = vmatprep.subr.mxu0 0.0
    %1415 = vmatpush1.msra.mxu0 %v1258
    %1416 = vmatprep.subr.mxu0 0.0
    %1417 = vmatpush1.msra.mxu0 %v1263
    %1418 = vmatprep.subr.mxu0 0.0
    %1419 = vmatpush1.msra.mxu0 0.0
    %1420 = vmatprep.subr.mxu0 0.0
    %1421 = vmatpush1.msra.mxu0 0.0
    %1422 = vmatprep.subr.mxu0 0.0
    %1423 = vmatpush1.msra.mxu0 0.0
    %1424 = vmatprep.subr.mxu0 0.0
    %1425 = vmatpush1.msra.mxu0 0.0
    %1426 = vmatprep.subr.mxu0 0.0
    %1427 = vmatpush1.msra.mxu0 0.0
    %1428 = vmatprep.subr.mxu0 0.0
    %1429 = vmatpush1.msra.mxu0 0.0
    %1430 = vmatprep.subr.mxu0 0.0
    %1431 = vmatpush1.msra.mxu0 0.0
    %1432 = vmatprep.subr.mxu0 0.0
    %1433 = vmatpush1.msra.mxu0 0.0
    %1434 = vmatprep.subr.mxu0 0.0
    %1435 = vmatpush1.msra.mxu0 0.0
    %1436 = vmatprep.subr.mxu0 0.0
    %1437 = vmatpush1.msra.mxu0 0.0
    %1438 = vmatprep.subr.mxu0 0.0
    %1439 = vmatpush1.msra.mxu0 0.0
    %1440 = vmatprep.subr.mxu0 0.0
    %1441 = vmatpush1.msra.mxu0 0.0
    %1442 = vmatprep.subr.mxu0 0.0
    %1443 = vmatpush1.msra.mxu0 0.0
    %1444 = vmatprep.subr.mxu0 0.0
    %1445 = vmatpush1.msra.mxu0 0.0
    %1446 = vmatprep.subr.mxu0 0.0
    %1447 = vmatpush1.msra.mxu0 0.0
    %1448 = vmatprep.subr.mxu0 0.0
    %1449 = vmatpush1.msra.mxu0 0.0
    %1450 = vmatprep.subr.mxu0 0.0
    %1451 = vmatpush1.msra.mxu0 0.0
    %1452 = vmatprep.subr.mxu0 0.0
    %1453 = vmatpush1.msra.mxu0 0.0
    %1454 = vmatprep.subr.mxu0 0.0
    %1455 = vmatpush1.msra.mxu0 0.0
    %1456 = vmatprep.subr.mxu0 0.0
    %1457 = vmatpush1.msra.mxu0 0.0
    %1458 = vmatprep.subr.mxu0 0.0
    %1459 = vmatpush1.msra.mxu0 0.0
    %1460 = vmatprep.subr.mxu0 0.0
    %1461 = vmatpush1.msra.mxu0 0.0
    %1462 = vmatprep.subr.mxu0 0.0
    %1463 = vmatpush1.msra.mxu0 0.0
    %1464 = vmatprep.subr.mxu0 0.0
    %1465 = vmatpush1.msra.mxu0 0.0
    %1466 = vmatprep.subr.mxu0 0.0
    %1467 = vmatpush1.msra.mxu0 0.0
    %1468 = vmatprep.subr.mxu0 0.0
    %1469 = vmatpush1.msra.mxu0 0.0
    %1470 = vmatprep.subr.mxu0 0.0
    %1471 = vmatpush1.msra.mxu0 0.0
    %1472 = vmatprep.subr.mxu0 0.0
    %1473 = vmatpush1.msra.mxu0 0.0
    %1474 = vmatprep.subr.mxu0 0.0
    %1475 = vmatpush1.msra.mxu0 0.0
    %1476 = vmatprep.subr.mxu0 0.0
    %1477 = vmatpush1.msra.mxu0 0.0
    %1478 = vmatprep.mubr.f32.mxu0 0.0
    %1479 = vmatmul.mubr.f32.gmra.mrb[0].mxu0 %v1409
    %v1480 = vpop.f32.mrb[0].mxu0
    %v1481 = vadd.f32 0.0, %v1480
    %v1482 = vpop.f32.mrb[0].mxu0
    %1483 = vmatprep.mubr.f32.mxu0 0.0
    %1484 = vmatmul.mubr.f32.gmra.mrb[0].mxu0 %v1412
    %v1485 = vpop.f32.mrb[0].mxu0
    %v1486 = vadd.f32 0.0, %v1485
    %v1487 = vpop.f32.mrb[0].mxu0
    %1488 = vdwg.mxu0
    %1489 = vrot.lane.b32.xlu0 %v1065, 120
    %v1490 = vpop.permute.xlu0 %1489
    %1491 = vrot.lane.b32.xlu0 %v1070, 120
    %v1492 = vpop.permute.xlu0 %1491
    %1493 = vrot.lane.b32.xlu0 %v1162, 120
    %v1494 = vpop.permute.xlu0 %1493
    %1495 = vrot.lane.b32.xlu0 %v1167, 120
    %v1496 = vpop.permute.xlu0 %1495
    %v1497 = vsel %vm1295, %v1490, 0
    %v1499 = vsel %vm1295, %v1492, 0
    %v1501 = vsel %vm1295, %v1494, 0
    %v1503 = vsel %vm1295, %v1496, 0
    %1505 = vmatprep.subr.mxu0 0.0
    %1506 = vmatpush1.xpose.msra.mxu0 %v1501
    %1507 = vmatprep.subr.mxu0 0.0
    %1508 = vmatpush1.xpose.msra.mxu0 %v1503
    %1509 = vmatprep.subr.mxu0 0.0
    %1510 = vmatpush1.xpose.msra.mxu0 0.0
    %1511 = vmatprep.subr.mxu0 0.0
    %1512 = vmatpush1.xpose.msra.mxu0 0.0
    %1513 = vmatprep.subr.mxu0 0.0
    %1514 = vmatpush1.xpose.msra.mxu0 0.0
    %1515 = vmatprep.subr.mxu0 0.0
    %1516 = vmatpush1.xpose.msra.mxu0 0.0
    %1517 = vmatprep.subr.mxu0 0.0
    %1518 = vmatpush1.xpose.msra.mxu0 0.0
    %1519 = vmatprep.subr.mxu0 0.0
    %1520 = vmatpush1.xpose.msra.mxu0 0.0
    %1521 = vmatprep.subr.mxu0 0.0
    %1522 = vmatpush1.xpose.msra.mxu0 0.0
    %1523 = vmatprep.subr.mxu0 0.0
    %1524 = vmatpush1.xpose.msra.mxu0 0.0
    %1525 = vmatprep.subr.mxu0 0.0
    %1526 = vmatpush1.xpose.msra.mxu0 0.0
    %1527 = vmatprep.subr.mxu0 0.0
    %1528 = vmatpush1.xpose.msra.mxu0 0.0
    %1529 = vmatprep.subr.mxu0 0.0
    %1530 = vmatpush1.xpose.msra.mxu0 0.0
    %1531 = vmatprep.subr.mxu0 0.0
    %1532 = vmatpush1.xpose.msra.mxu0 0.0
    %1533 = vmatprep.subr.mxu0 0.0
    %1534 = vmatpush1.xpose.msra.mxu0 0.0
    %1535 = vmatprep.subr.mxu0 0.0
    %1536 = vmatpush1.xpose.msra.mxu0 0.0
    %1537 = vmatprep.subr.mxu0 0.0
    %1538 = vmatpush1.xpose.msra.mxu0 0.0
    %1539 = vmatprep.subr.mxu0 0.0
    %1540 = vmatpush1.xpose.msra.mxu0 0.0
    %1541 = vmatprep.subr.mxu0 0.0
    %1542 = vmatpush1.xpose.msra.mxu0 0.0
    %1543 = vmatprep.subr.mxu0 0.0
    %1544 = vmatpush1.xpose.msra.mxu0 0.0
    %1545 = vmatprep.subr.mxu0 0.0
    %1546 = vmatpush1.xpose.msra.mxu0 0.0
    %1547 = vmatprep.subr.mxu0 0.0
    %1548 = vmatpush1.xpose.msra.mxu0 0.0
    %1549 = vmatprep.subr.mxu0 0.0
    %1550 = vmatpush1.xpose.msra.mxu0 0.0
    %1551 = vmatprep.subr.mxu0 0.0
    %1552 = vmatpush1.xpose.msra.mxu0 0.0
    %1553 = vmatprep.subr.mxu0 0.0
    %1554 = vmatpush1.xpose.msra.mxu0 0.0
    %1555 = vmatprep.subr.mxu0 0.0
    %1556 = vmatpush1.xpose.msra.mxu0 0.0
    %1557 = vmatprep.subr.mxu0 0.0
    %1558 = vmatpush1.xpose.msra.mxu0 0.0
    %1559 = vmatprep.subr.mxu0 0.0
    %1560 = vmatpush1.xpose.msra.mxu0 0.0
    %1561 = vmatprep.subr.mxu0 0.0
    %1562 = vmatpush1.xpose.msra.mxu0 0.0
    %1563 = vmatprep.subr.mxu0 0.0
    %1564 = vmatpush1.xpose.msra.mxu0 0.0
    %1565 = vmatprep.subr.mxu0 0.0
    %1566 = vmatpush1.xpose.msra.mxu0 0.0
    %1567 = vmatprep.subr.mxu0 0.0
    %1568 = vmatpush1.xpose.msra.mxu0 0.0
    %1569 = vmatprep.mubr.f32.mxu0 0.0
    %1570 = vmatmul.mubr.f32.gmra.mrb[0].mxu0 %v1497
    %v1571 = vpop.f32.mrb[0].mxu0
    %v1572 = vadd.f32 0.0, %v1571
    %v1573 = vpop.f32.mrb[0].mxu0
    %1574 = vmatprep.mubr.f32.mxu0 0.0
    %1575 = vmatmul.mubr.f32.gmra.mrb[0].mxu0 %v1499
    %v1576 = vpop.f32.mrb[0].mxu0
    %v1577 = vadd.f32 0.0, %v1576
    %v1578 = vpop.f32.mrb[0].mxu0
    %1579 = vdwg.mxu0
    %v1580 = vsel %vm1293, %v1572, -1e+30
    %v1581 = vsel %vm1294, %v1577, -1e+30
    %v1582 = vsel %vm1385, %v1580, -inf
    %1583 = vmax.xlane.f32.xlu0 %v1582
    %v1584 = vpop.xlane.xlu0 %1583
    %v1585 = vsel %vm1385, %v1581, -inf
    %1586 = vmax.xlane.f32.xlu0 %v1585
    %v1587 = vpop.xlane.xlu0 %1586
    %v1588 = vsub.f32 %v1580, %v1584
    %v1589 = vsub.f32 %v1581, %v1587
    %v1590 = vmul.f32 %v1588, 1.442695
    %v1591 = vpow.pop %v1590
    %v1592 = vmul.f32 %v1589, 1.442695
    %v1593 = vpow.pop %v1592
    %v1594 = vsel %vm1385, %v1591, 0.0
    %1595 = vadd.xlane.f32.xlu0 %v1594
    %v1596 = vpop.xlane.xlu0 %1595
    %v1597 = vsel %vm1385, %v1593, 0.0
    %1598 = vadd.xlane.f32.xlu0 %v1597
    %v1599 = vpop.xlane.xlu0 %1598
    %v1600 = vrcp.pop %v1596
    %v1601 = vmul.f32 %v1591, %v1600
    %v1602 = vrcp.pop %v1599
    %v1603 = vmul.f32 %v1593, %v1602
    %1606 = vrot.lane.b32.xlu0 %v1258, 120
    %v1607 = vpop.permute.xlu0 %1606
    %1608 = vrot.lane.b32.xlu0 %v1263, 120
    %v1609 = vpop.permute.xlu0 %1608
    %v1613 = vsel %vm1385, %v1601, 0
    %v1616 = vsel %vm1385, %v1603, 0
    %1618 = vmatprep.subr.mxu0 0.0
    %1619 = vmatpush1.msra.mxu0 %v1607
    %1620 = vmatprep.subr.mxu0 0.0
    %1621 = vmatpush1.msra.mxu0 %v1609
    %1622 = vmatprep.subr.mxu0 0.0
    %1623 = vmatpush1.msra.mxu0 0.0
    %1624 = vmatprep.subr.mxu0 0.0
    %1625 = vmatpush1.msra.mxu0 0.0
    %1626 = vmatprep.subr.mxu0 0.0
    %1627 = vmatpush1.msra.mxu0 0.0
    %1628 = vmatprep.subr.mxu0 0.0
    %1629 = vmatpush1.msra.mxu0 0.0
    %1630 = vmatprep.subr.mxu0 0.0
    %1631 = vmatpush1.msra.mxu0 0.0
    %1632 = vmatprep.subr.mxu0 0.0
    %1633 = vmatpush1.msra.mxu0 0.0
    %1634 = vmatprep.subr.mxu0 0.0
    %1635 = vmatpush1.msra.mxu0 0.0
    %1636 = vmatprep.subr.mxu0 0.0
    %1637 = vmatpush1.msra.mxu0 0.0
    %1638 = vmatprep.subr.mxu0 0.0
    %1639 = vmatpush1.msra.mxu0 0.0
    %1640 = vmatprep.subr.mxu0 0.0
    %1641 = vmatpush1.msra.mxu0 0.0
    %1642 = vmatprep.subr.mxu0 0.0
    %1643 = vmatpush1.msra.mxu0 0.0
    %1644 = vmatprep.subr.mxu0 0.0
    %1645 = vmatpush1.msra.mxu0 0.0
    %1646 = vmatprep.subr.mxu0 0.0
    %1647 = vmatpush1.msra.mxu0 0.0
    %1648 = vmatprep.subr.mxu0 0.0
    %1649 = vmatpush1.msra.mxu0 0.0
    %1650 = vmatprep.subr.mxu0 0.0
    %1651 = vmatpush1.msra.mxu0 0.0
    %1652 = vmatprep.subr.mxu0 0.0
    %1653 = vmatpush1.msra.mxu0 0.0
    %1654 = vmatprep.subr.mxu0 0.0
    %1655 = vmatpush1.msra.mxu0 0.0
    %1656 = vmatprep.subr.mxu0 0.0
    %1657 = vmatpush1.msra.mxu0 0.0
    %1658 = vmatprep.subr.mxu0 0.0
    %1659 = vmatpush1.msra.mxu0 0.0
    %1660 = vmatprep.subr.mxu0 0.0
    %1661 = vmatpush1.msra.mxu0 0.0
    %1662 = vmatprep.subr.mxu0 0.0
    %1663 = vmatpush1.msra.mxu0 0.0
    %1664 = vmatprep.subr.mxu0 0.0
    %1665 = vmatpush1.msra.mxu0 0.0
    %1666 = vmatprep.subr.mxu0 0.0
    %1667 = vmatpush1.msra.mxu0 0.0
    %1668 = vmatprep.subr.mxu0 0.0
    %1669 = vmatpush1.msra.mxu0 0.0
    %1670 = vmatprep.subr.mxu0 0.0
    %1671 = vmatpush1.msra.mxu0 0.0
    %1672 = vmatprep.subr.mxu0 0.0
    %1673 = vmatpush1.msra.mxu0 0.0
    %1674 = vmatprep.subr.mxu0 0.0
    %1675 = vmatpush1.msra.mxu0 0.0
    %1676 = vmatprep.subr.mxu0 0.0
    %1677 = vmatpush1.msra.mxu0 0.0
    %1678 = vmatprep.subr.mxu0 0.0
    %1679 = vmatpush1.msra.mxu0 0.0
    %1680 = vmatprep.subr.mxu0 0.0
    %1681 = vmatpush1.msra.mxu0 0.0
    %1682 = vmatprep.mubr.f32.mxu0 0.0
    %1683 = vmatmul.mubr.f32.gmra.mrb[0].mxu0 %v1613
    %v1684 = vpop.f32.mrb[0].mxu0
    %v1685 = vadd.f32 0.0, %v1684
    %v1686 = vpop.f32.mrb[0].mxu0
    %1687 = vmatprep.mubr.f32.mxu0 0.0
    %1688 = vmatmul.mubr.f32.gmra.mrb[0].mxu0 %v1616
    %v1689 = vpop.f32.mrb[0].mxu0
    %v1690 = vadd.f32 0.0, %v1689
    %v1691 = vpop.f32.mrb[0].mxu0
    %1692 = vdwg.mxu0
    %1693 = vrot.lane.b32.xlu0 %v1065, 112
    %v1694 = vpop.permute.xlu0 %1693
    %1695 = vrot.lane.b32.xlu0 %v1070, 112
    %v1696 = vpop.permute.xlu0 %1695
    %1697 = vrot.lane.b32.xlu0 %v1162, 112
    %v1698 = vpop.permute.xlu0 %1697
    %1699 = vrot.lane.b32.xlu0 %v1167, 112
    %v1700 = vpop.permute.xlu0 %1699
    %v1701 = vsel %vm1295, %v1694, 0
    %v1703 = vsel %vm1295, %v1696, 0
    %v1705 = vsel %vm1295, %v1698, 0
    %v1707 = vsel %vm1295, %v1700, 0
    %1709 = vmatprep.subr.mxu0 0.0
    %1710 = vmatpush1.xpose.msra.mxu0 %v1705
    %1711 = vmatprep.subr.mxu0 0.0
    %1712 = vmatpush1.xpose.msra.mxu0 %v1707
    %1713 = vmatprep.subr.mxu0 0.0
    %1714 = vmatpush1.xpose.msra.mxu0 0.0
    %1715 = vmatprep.subr.mxu0 0.0
    %1716 = vmatpush1.xpose.msra.mxu0 0.0
    %1717 = vmatprep.subr.mxu0 0.0
    %1718 = vmatpush1.xpose.msra.mxu0 0.0
    %1719 = vmatprep.subr.mxu0 0.0
    %1720 = vmatpush1.xpose.msra.mxu0 0.0
    %1721 = vmatprep.subr.mxu0 0.0
    %1722 = vmatpush1.xpose.msra.mxu0 0.0
    %1723 = vmatprep.subr.mxu0 0.0
    %1724 = vmatpush1.xpose.msra.mxu0 0.0
    %1725 = vmatprep.subr.mxu0 0.0
    %1726 = vmatpush1.xpose.msra.mxu0 0.0
    %1727 = vmatprep.subr.mxu0 0.0
    %1728 = vmatpush1.xpose.msra.mxu0 0.0
    %1729 = vmatprep.subr.mxu0 0.0
    %1730 = vmatpush1.xpose.msra.mxu0 0.0
    %1731 = vmatprep.subr.mxu0 0.0
    %1732 = vmatpush1.xpose.msra.mxu0 0.0
    %1733 = vmatprep.subr.mxu0 0.0
    %1734 = vmatpush1.xpose.msra.mxu0 0.0
    %1735 = vmatprep.subr.mxu0 0.0
    %1736 = vmatpush1.xpose.msra.mxu0 0.0
    %1737 = vmatprep.subr.mxu0 0.0
    %1738 = vmatpush1.xpose.msra.mxu0 0.0
    %1739 = vmatprep.subr.mxu0 0.0
    %1740 = vmatpush1.xpose.msra.mxu0 0.0
    %1741 = vmatprep.subr.mxu0 0.0
    %1742 = vmatpush1.xpose.msra.mxu0 0.0
    %1743 = vmatprep.subr.mxu0 0.0
    %1744 = vmatpush1.xpose.msra.mxu0 0.0
    %1745 = vmatprep.subr.mxu0 0.0
    %1746 = vmatpush1.xpose.msra.mxu0 0.0
    %1747 = vmatprep.subr.mxu0 0.0
    %1748 = vmatpush1.xpose.msra.mxu0 0.0
    %1749 = vmatprep.subr.mxu0 0.0
    %1750 = vmatpush1.xpose.msra.mxu0 0.0
    %1751 = vmatprep.subr.mxu0 0.0
    %1752 = vmatpush1.xpose.msra.mxu0 0.0
    %1753 = vmatprep.subr.mxu0 0.0
    %1754 = vmatpush1.xpose.msra.mxu0 0.0
    %1755 = vmatprep.subr.mxu0 0.0
    %1756 = vmatpush1.xpose.msra.mxu0 0.0
    %1757 = vmatprep.subr.mxu0 0.0
    %1758 = vmatpush1.xpose.msra.mxu0 0.0
    %1759 = vmatprep.subr.mxu0 0.0
    %1760 = vmatpush1.xpose.msra.mxu0 0.0
    %1761 = vmatprep.subr.mxu0 0.0
    %1762 = vmatpush1.xpose.msra.mxu0 0.0
    %1763 = vmatprep.subr.mxu0 0.0
    %1764 = vmatpush1.xpose.msra.mxu0 0.0
    %1765 = vmatprep.subr.mxu0 0.0
    %1766 = vmatpush1.xpose.msra.mxu0 0.0
    %1767 = vmatprep.subr.mxu0 0.0
    %1768 = vmatpush1.xpose.msra.mxu0 0.0
    %1769 = vmatprep.subr.mxu0 0.0
    %1770 = vmatpush1.xpose.msra.mxu0 0.0
    %1771 = vmatprep.subr.mxu0 0.0
    %1772 = vmatpush1.xpose.msra.mxu0 0.0
    %1773 = vmatprep.mubr.f32.mxu0 0.0
    %1774 = vmatmul.mubr.f32.gmra.mrb[0].mxu0 %v1701
    %v1775 = vpop.f32.mrb[0].mxu0
    %v1776 = vadd.f32 0.0, %v1775
    %v1777 = vpop.f32.mrb[0].mxu0
    %1778 = vmatprep.mubr.f32.mxu0 0.0
    %1779 = vmatmul.mubr.f32.gmra.mrb[0].mxu0 %v1703
    %v1780 = vpop.f32.mrb[0].mxu0
    %v1781 = vadd.f32 0.0, %v1780
    %v1782 = vpop.f32.mrb[0].mxu0
    %1783 = vdwg.mxu0
    %v1784 = vsel %vm1293, %v1776, -1e+30
    %v1785 = vsel %vm1294, %v1781, -1e+30
    %v1786 = vsel %vm1385, %v1784, -inf
    %1787 = vmax.xlane.f32.xlu0 %v1786
    %v1788 = vpop.xlane.xlu0 %1787
    %v1789 = vsel %vm1385, %v1785, -inf
    %1790 = vmax.xlane.f32.xlu0 %v1789
    %v1791 = vpop.xlane.xlu0 %1790
    %v1792 = vsub.f32 %v1784, %v1788
    %v1793 = vsub.f32 %v1785, %v1791
    %v1794 = vmul.f32 %v1792, 1.442695
    %v1795 = vpow.pop %v1794
    %v1796 = vmul.f32 %v1793, 1.442695
    %v1797 = vpow.pop %v1796
    %v1798 = vsel %vm1385, %v1795, 0.0
    %1799 = vadd.xlane.f32.xlu0 %v1798
    %v1800 = vpop.xlane.xlu0 %1799
    %v1801 = vsel %vm1385, %v1797, 0.0
    %1802 = vadd.xlane.f32.xlu0 %v1801
    %v1803 = vpop.xlane.xlu0 %1802
    %v1804 = vrcp.pop %v1800
    %v1805 = vmul.f32 %v1795, %v1804
    %v1806 = vrcp.pop %v1803
    %v1807 = vmul.f32 %v1797, %v1806
    %1808 = vrot.lane.b32.xlu0 %v1258, 112
    %v1809 = vpop.permute.xlu0 %1808
    %1810 = vrot.lane.b32.xlu0 %v1263, 112
    %v1811 = vpop.permute.xlu0 %1810
    %v1815 = vsel %vm1385, %v1805, 0
    %v1818 = vsel %vm1385, %v1807, 0
    %1820 = vmatprep.subr.mxu0 0.0
    %1821 = vmatpush1.msra.mxu0 %v1809
    %1822 = vmatprep.subr.mxu0 0.0
    %1823 = vmatpush1.msra.mxu0 %v1811
    %1824 = vmatprep.subr.mxu0 0.0
    %1825 = vmatpush1.msra.mxu0 0.0
    %1826 = vmatprep.subr.mxu0 0.0
    %1827 = vmatpush1.msra.mxu0 0.0
    %1828 = vmatprep.subr.mxu0 0.0
    %1829 = vmatpush1.msra.mxu0 0.0
    %1830 = vmatprep.subr.mxu0 0.0
    %1831 = vmatpush1.msra.mxu0 0.0
    %1832 = vmatprep.subr.mxu0 0.0
    %1833 = vmatpush1.msra.mxu0 0.0
    %1834 = vmatprep.subr.mxu0 0.0
    %1835 = vmatpush1.msra.mxu0 0.0
    %1836 = vmatprep.subr.mxu0 0.0
    %1837 = vmatpush1.msra.mxu0 0.0
    %1838 = vmatprep.subr.mxu0 0.0
    %1839 = vmatpush1.msra.mxu0 0.0
    %1840 = vmatprep.subr.mxu0 0.0
    %1841 = vmatpush1.msra.mxu0 0.0
    %1842 = vmatprep.subr.mxu0 0.0
    %1843 = vmatpush1.msra.mxu0 0.0
    %1844 = vmatprep.subr.mxu0 0.0
    %1845 = vmatpush1.msra.mxu0 0.0
    %1846 = vmatprep.subr.mxu0 0.0
    %1847 = vmatpush1.msra.mxu0 0.0
    %1848 = vmatprep.subr.mxu0 0.0
    %1849 = vmatpush1.msra.mxu0 0.0
    %1850 = vmatprep.subr.mxu0 0.0
    %1851 = vmatpush1.msra.mxu0 0.0
    %1852 = vmatprep.subr.mxu0 0.0
    %1853 = vmatpush1.msra.mxu0 0.0
    %1854 = vmatprep.subr.mxu0 0.0
    %1855 = vmatpush1.msra.mxu0 0.0
    %1856 = vmatprep.subr.mxu0 0.0
    %1857 = vmatpush1.msra.mxu0 0.0
    %1858 = vmatprep.subr.mxu0 0.0
    %1859 = vmatpush1.msra.mxu0 0.0
    %1860 = vmatprep.subr.mxu0 0.0
    %1861 = vmatpush1.msra.mxu0 0.0
    %1862 = vmatprep.subr.mxu0 0.0
    %1863 = vmatpush1.msra.mxu0 0.0
    %1864 = vmatprep.subr.mxu0 0.0
    %1865 = vmatpush1.msra.mxu0 0.0
    %1866 = vmatprep.subr.mxu0 0.0
    %1867 = vmatpush1.msra.mxu0 0.0
    %1868 = vmatprep.subr.mxu0 0.0
    %1869 = vmatpush1.msra.mxu0 0.0
    %1870 = vmatprep.subr.mxu0 0.0
    %1871 = vmatpush1.msra.mxu0 0.0
    %1872 = vmatprep.subr.mxu0 0.0
    %1873 = vmatpush1.msra.mxu0 0.0
    %1874 = vmatprep.subr.mxu0 0.0
    %1875 = vmatpush1.msra.mxu0 0.0
    %1876 = vmatprep.subr.mxu0 0.0
    %1877 = vmatpush1.msra.mxu0 0.0
    %1878 = vmatprep.subr.mxu0 0.0
    %1879 = vmatpush1.msra.mxu0 0.0
    %1880 = vmatprep.subr.mxu0 0.0
    %1881 = vmatpush1.msra.mxu0 0.0
    %1882 = vmatprep.subr.mxu0 0.0
    %1883 = vmatpush1.msra.mxu0 0.0
    %1884 = vmatprep.mubr.f32.mxu0 0.0
    %1885 = vmatmul.mubr.f32.gmra.mrb[0].mxu0 %v1815
    %v1886 = vpop.f32.mrb[0].mxu0
    %v1887 = vadd.f32 0.0, %v1886
    %v1888 = vpop.f32.mrb[0].mxu0
    %1889 = vmatprep.mubr.f32.mxu0 0.0
    %1890 = vmatmul.mubr.f32.gmra.mrb[0].mxu0 %v1818
    %v1891 = vpop.f32.mrb[0].mxu0
    %v1892 = vadd.f32 0.0, %v1891
    %v1893 = vpop.f32.mrb[0].mxu0
    %1894 = vdwg.mxu0
    %1895 = vrot.lane.b32.xlu0 %v1065, 104
    %v1896 = vpop.permute.xlu0 %1895
    %1897 = vrot.lane.b32.xlu0 %v1070, 104
    %v1898 = vpop.permute.xlu0 %1897
    %1899 = vrot.lane.b32.xlu0 %v1162, 104
    %v1900 = vpop.permute.xlu0 %1899
    %1901 = vrot.lane.b32.xlu0 %v1167, 104
    %v1902 = vpop.permute.xlu0 %1901
    %v1903 = vsel %vm1295, %v1896, 0
    %v1905 = vsel %vm1295, %v1898, 0
    %v1907 = vsel %vm1295, %v1900, 0
    %v1909 = vsel %vm1295, %v1902, 0
    %1911 = vmatprep.subr.mxu0 0.0
    %1912 = vmatpush1.xpose.msra.mxu0 %v1907
    %1913 = vmatprep.subr.mxu0 0.0
    %1914 = vmatpush1.xpose.msra.mxu0 %v1909
    %1915 = vmatprep.subr.mxu0 0.0
    %1916 = vmatpush1.xpose.msra.mxu0 0.0
    %1917 = vmatprep.subr.mxu0 0.0
    %1918 = vmatpush1.xpose.msra.mxu0 0.0
    %1919 = vmatprep.subr.mxu0 0.0
    %1920 = vmatpush1.xpose.msra.mxu0 0.0
    %1921 = vmatprep.subr.mxu0 0.0
    %1922 = vmatpush1.xpose.msra.mxu0 0.0
    %1923 = vmatprep.subr.mxu0 0.0
    %1924 = vmatpush1.xpose.msra.mxu0 0.0
    %1925 = vmatprep.subr.mxu0 0.0
    %1926 = vmatpush1.xpose.msra.mxu0 0.0
    %1927 = vmatprep.subr.mxu0 0.0
    %1928 = vmatpush1.xpose.msra.mxu0 0.0
    %1929 = vmatprep.subr.mxu0 0.0
    %1930 = vmatpush1.xpose.msra.mxu0 0.0
    %1931 = vmatprep.subr.mxu0 0.0
    %1932 = vmatpush1.xpose.msra.mxu0 0.0
    %1933 = vmatprep.subr.mxu0 0.0
    %1934 = vmatpush1.xpose.msra.mxu0 0.0
    %1935 = vmatprep.subr.mxu0 0.0
    %1936 = vmatpush1.xpose.msra.mxu0 0.0
    %1937 = vmatprep.subr.mxu0 0.0
    %1938 = vmatpush1.xpose.msra.mxu0 0.0
    %1939 = vmatprep.subr.mxu0 0.0
    %1940 = vmatpush1.xpose.msra.mxu0 0.0
    %1941 = vmatprep.subr.mxu0 0.0
    %1942 = vmatpush1.xpose.msra.mxu0 0.0
    %1943 = vmatprep.subr.mxu0 0.0
    %1944 = vmatpush1.xpose.msra.mxu0 0.0
    %1945 = vmatprep.subr.mxu0 0.0
    %1946 = vmatpush1.xpose.msra.mxu0 0.0
    %1947 = vmatprep.subr.mxu0 0.0
    %1948 = vmatpush1.xpose.msra.mxu0 0.0
    %1949 = vmatprep.subr.mxu0 0.0
    %1950 = vmatpush1.xpose.msra.mxu0 0.0
    %1951 = vmatprep.subr.mxu0 0.0
    %1952 = vmatpush1.xpose.msra.mxu0 0.0
    %1953 = vmatprep.subr.mxu0 0.0
    %1954 = vmatpush1.xpose.msra.mxu0 0.0
    %1955 = vmatprep.subr.mxu0 0.0
    %1956 = vmatpush1.xpose.msra.mxu0 0.0
    %1957 = vmatprep.subr.mxu0 0.0
    %1958 = vmatpush1.xpose.msra.mxu0 0.0
    %1959 = vmatprep.subr.mxu0 0.0
    %1960 = vmatpush1.xpose.msra.mxu0 0.0
    %1961 = vmatprep.subr.mxu0 0.0
    %1962 = vmatpush1.xpose.msra.mxu0 0.0
    %1963 = vmatprep.subr.mxu0 0.0
    %1964 = vmatpush1.xpose.msra.mxu0 0.0
    %1965 = vmatprep.subr.mxu0 0.0
    %1966 = vmatpush1.xpose.msra.mxu0 0.0
    %1967 = vmatprep.subr.mxu0 0.0
    %1968 = vmatpush1.xpose.msra.mxu0 0.0
    %1969 = vmatprep.subr.mxu0 0.0
    %1970 = vmatpush1.xpose.msra.mxu0 0.0
    %1971 = vmatprep.subr.mxu0 0.0
    %1972 = vmatpush1.xpose.msra.mxu0 0.0
    %1973 = vmatprep.subr.mxu0 0.0
    %1974 = vmatpush1.xpose.msra.mxu0 0.0
    %1975 = vmatprep.mubr.f32.mxu0 0.0
    %1976 = vmatmul.mubr.f32.gmra.mrb[0].mxu0 %v1903
    %v1977 = vpop.f32.mrb[0].mxu0
    %v1978 = vadd.f32 0.0, %v1977
    %v1979 = vpop.f32.mrb[0].mxu0
    %1980 = vmatprep.mubr.f32.mxu0 0.0
    %1981 = vmatmul.mubr.f32.gmra.mrb[0].mxu0 %v1905
    %v1982 = vpop.f32.mrb[0].mxu0
    %v1983 = vadd.f32 0.0, %v1982
    %v1984 = vpop.f32.mrb[0].mxu0
    %1985 = vdwg.mxu0
    %v1986 = vsel %vm1293, %v1978, -1e+30
    %v1987 = vsel %vm1294, %v1983, -1e+30
    %v1988 = vsel %vm1385, %v1986, -inf
    %1989 = vmax.xlane.f32.xlu0 %v1988
    %v1990 = vpop.xlane.xlu0 %1989
    %v1991 = vsel %vm1385, %v1987, -inf
    %1992 = vmax.xlane.f32.xlu0 %v1991
    %v1993 = vpop.xlane.xlu0 %1992
    %v1994 = vsub.f32 %v1986, %v1990
    %v1995 = vsub.f32 %v1987, %v1993
    %v1996 = vmul.f32 %v1994, 1.442695
    %v1997 = vpow.pop %v1996
    %v1998 = vmul.f32 %v1995, 1.442695
    %v1999 = vpow.pop %v1998
    %v2000 = vsel %vm1385, %v1997, 0.0
    %2001 = vadd.xlane.f32.xlu0 %v2000
    %v2002 = vpop.xlane.xlu0 %2001
    %v2003 = vsel %vm1385, %v1999, 0.0
    %2004 = vadd.xlane.f32.xlu0 %v2003
    %v2005 = vpop.xlane.xlu0 %2004
    %v2006 = vrcp.pop %v2002
    %v2007 = vmul.f32 %v1997, %v2006
    %v2008 = vrcp.pop %v2005
    %v2009 = vmul.f32 %v1999, %v2008
    %2010 = vrot.lane.b32.xlu0 %v1258, 104
    %v2011 = vpop.permute.xlu0 %2010
    %2012 = vrot.lane.b32.xlu0 %v1263, 104
    %v2013 = vpop.permute.xlu0 %2012
    %v2017 = vsel %vm1385, %v2007, 0
    %v2020 = vsel %vm1385, %v2009, 0
    %2022 = vmatprep.subr.mxu0 0.0
    %2023 = vmatpush1.msra.mxu0 %v2011
    %2024 = vmatprep.subr.mxu0 0.0
    %2025 = vmatpush1.msra.mxu0 %v2013
    %2026 = vmatprep.subr.mxu0 0.0
    %2027 = vmatpush1.msra.mxu0 0.0
    %2028 = vmatprep.subr.mxu0 0.0
    %2029 = vmatpush1.msra.mxu0 0.0
    %2030 = vmatprep.subr.mxu0 0.0
    %2031 = vmatpush1.msra.mxu0 0.0
    %2032 = vmatprep.subr.mxu0 0.0
    %2033 = vmatpush1.msra.mxu0 0.0
    %2034 = vmatprep.subr.mxu0 0.0
    %2035 = vmatpush1.msra.mxu0 0.0
    %2036 = vmatprep.subr.mxu0 0.0
    %2037 = vmatpush1.msra.mxu0 0.0
    %2038 = vmatprep.subr.mxu0 0.0
    %2039 = vmatpush1.msra.mxu0 0.0
    %2040 = vmatprep.subr.mxu0 0.0
    %2041 = vmatpush1.msra.mxu0 0.0
    %2042 = vmatprep.subr.mxu0 0.0
    %2043 = vmatpush1.msra.mxu0 0.0
    %2044 = vmatprep.subr.mxu0 0.0
    %2045 = vmatpush1.msra.mxu0 0.0
    %2046 = vmatprep.subr.mxu0 0.0
    %2047 = vmatpush1.msra.mxu0 0.0
    %2048 = vmatprep.subr.mxu0 0.0
    %2049 = vmatpush1.msra.mxu0 0.0
    %2050 = vmatprep.subr.mxu0 0.0
    %2051 = vmatpush1.msra.mxu0 0.0
    %2052 = vmatprep.subr.mxu0 0.0
    %2053 = vmatpush1.msra.mxu0 0.0
    %2054 = vmatprep.subr.mxu0 0.0
    %2055 = vmatpush1.msra.mxu0 0.0
    %2056 = vmatprep.subr.mxu0 0.0
    %2057 = vmatpush1.msra.mxu0 0.0
    %2058 = vmatprep.subr.mxu0 0.0
    %2059 = vmatpush1.msra.mxu0 0.0
    %2060 = vmatprep.subr.mxu0 0.0
    %2061 = vmatpush1.msra.mxu0 0.0
    %2062 = vmatprep.subr.mxu0 0.0
    %2063 = vmatpush1.msra.mxu0 0.0
    %2064 = vmatprep.subr.mxu0 0.0
    %2065 = vmatpush1.msra.mxu0 0.0
    %2066 = vmatprep.subr.mxu0 0.0
    %2067 = vmatpush1.msra.mxu0 0.0
    %2068 = vmatprep.subr.mxu0 0.0
    %2069 = vmatpush1.msra.mxu0 0.0
    %2070 = vmatprep.subr.mxu0 0.0
    %2071 = vmatpush1.msra.mxu0 0.0
    %2072 = vmatprep.subr.mxu0 0.0
    %2073 = vmatpush1.msra.mxu0 0.0
    %2074 = vmatprep.subr.mxu0 0.0
    %2075 = vmatpush1.msra.mxu0 0.0
    %2076 = vmatprep.subr.mxu0 0.0
    %2077 = vmatpush1.msra.mxu0 0.0
    %2078 = vmatprep.subr.mxu0 0.0
    %2079 = vmatpush1.msra.mxu0 0.0
    %2080 = vmatprep.subr.mxu0 0.0
    %2081 = vmatpush1.msra.mxu0 0.0
    %2082 = vmatprep.subr.mxu0 0.0
    %2083 = vmatpush1.msra.mxu0 0.0
    %2084 = vmatprep.subr.mxu0 0.0
    %2085 = vmatpush1.msra.mxu0 0.0
    %2086 = vmatprep.mubr.f32.mxu0 0.0
    %2087 = vmatmul.mubr.f32.gmra.mrb[0].mxu0 %v2017
    %v2088 = vpop.f32.mrb[0].mxu0
    %v2089 = vadd.f32 0.0, %v2088
    %v2090 = vpop.f32.mrb[0].mxu0
    %2091 = vmatprep.mubr.f32.mxu0 0.0
    %2092 = vmatmul.mubr.f32.gmra.mrb[0].mxu0 %v2020
    %v2093 = vpop.f32.mrb[0].mxu0
    %v2094 = vadd.f32 0.0, %v2093
    %v2095 = vpop.f32.mrb[0].mxu0
    %2096 = vdwg.mxu0
    %2099 = vrot.lane.b32.xlu0 %v1685, 8
    %v2100 = vpop.permute.xlu0 %2099
    %2101 = vrot.lane.b32.xlu0 %v1690, 8
    %v2102 = vpop.permute.xlu0 %2101
    %2107 = vrot.lane.b32.xlu0 %v1887, 16
    %v2108 = vpop.permute.xlu0 %2107
    %2109 = vrot.lane.b32.xlu0 %v1892, 16
    %v2110 = vpop.permute.xlu0 %2109
    %2115 = vrot.lane.b32.xlu0 %v2089, 24
    %v2116 = vpop.permute.xlu0 %2115
    %2117 = vrot.lane.b32.xlu0 %v2094, 24
    %v2118 = vpop.permute.xlu0 %2117
    %v2121 = vsel %vm1295, %v1481, %v2100
    %v2122 = vsel %vm1295, %v1486, %v2102
    %v2123 = vsel %vm1385, %v2121, %v2108
    %v2124 = vsel %vm1385, %v2122, %v2110
    %v2125 = vsel %vm130, %v2123, %v2116
    %v2126 = vsel %vm130, %v2124, %v2118
    %v2127 = vlaneseq
    %v2128 = vshrl.u32 %v2127, 7
    %v2129 = vsub.s32 2, %v2128
    %v2130 = vrot.slane %v16, %v2129
    %v2132 = vsel %vm33, %v2125, 0
    %v2135 = vsel %vm33, %v2126, 0
    %v2138 = vsel %vm33, %v960, 0
    %v2141 = vsel %vm33, %v961, 0
    %v2144 = vsel %vm33, %v962, 0
    %v2147 = vsel %vm33, %v963, 0
    %v2150 = vsel %vm33, %v964, 0
    %v2153 = vsel %vm33, %v965, 0
    %v2156 = vsel %vm33, %v966, 0
    %v2159 = vsel %vm33, %v967, 0
    %v2162 = vsel %vm33, %v968, 0
    %v2165 = vsel %vm33, %v969, 0
    %v2168 = vsel %vm33, %v970, 0
    %v2171 = vsel %vm33, %v971, 0
    %v2174 = vsel %vm33, %v972, 0
    %v2177 = vsel %vm33, %v973, 0
    %v2180 = vsel %vm33, %v974, 0
    %v2183 = vsel %vm33, %v975, 0
    %2185 = vmatprep.subr.mxu0 0.0
    %2186 = vmatpush1.xpose.msra.mxu0 %v2138
    %2187 = vmatprep.subr.mxu0 0.0
    %2188 = vmatpush1.xpose.msra.mxu0 %v2141
    %2189 = vmatprep.subr.mxu0 0.0
    %2190 = vmatpush1.xpose.msra.mxu0 %v2144
    %2191 = vmatprep.subr.mxu0 0.0
    %2192 = vmatpush1.xpose.msra.mxu0 %v2147
    %2193 = vmatprep.subr.mxu0 0.0
    %2194 = vmatpush1.xpose.msra.mxu0 %v2150
    %2195 = vmatprep.subr.mxu0 0.0
    %2196 = vmatpush1.xpose.msra.mxu0 %v2153
    %2197 = vmatprep.subr.mxu0 0.0
    %2198 = vmatpush1.xpose.msra.mxu0 %v2156
    %2199 = vmatprep.subr.mxu0 0.0
    %2200 = vmatpush1.xpose.msra.mxu0 %v2159
    %2201 = vmatprep.subr.mxu0 0.0
    %2202 = vmatpush1.xpose.msra.mxu0 %v2162
    %2203 = vmatprep.subr.mxu0 0.0
    %2204 = vmatpush1.xpose.msra.mxu0 %v2165
    %2205 = vmatprep.subr.mxu0 0.0
    %2206 = vmatpush1.xpose.msra.mxu0 %v2168
    %2207 = vmatprep.subr.mxu0 0.0
    %2208 = vmatpush1.xpose.msra.mxu0 %v2171
    %2209 = vmatprep.subr.mxu0 0.0
    %2210 = vmatpush1.xpose.msra.mxu0 %v2174
    %2211 = vmatprep.subr.mxu0 0.0
    %2212 = vmatpush1.xpose.msra.mxu0 %v2177
    %2213 = vmatprep.subr.mxu0 0.0
    %2214 = vmatpush1.xpose.msra.mxu0 %v2180
    %2215 = vmatprep.subr.mxu0 0.0
    %2216 = vmatpush1.xpose.msra.mxu0 %v2183
    %2217 = vmatprep.subr.mxu0 0.0
    %2218 = vmatpush1.xpose.msra.mxu0 0.0
    %2219 = vmatprep.subr.mxu0 0.0
    %2220 = vmatpush1.xpose.msra.mxu0 0.0
    %2221 = vmatprep.subr.mxu0 0.0
    %2222 = vmatpush1.xpose.msra.mxu0 0.0
    %2223 = vmatprep.subr.mxu0 0.0
    %2224 = vmatpush1.xpose.msra.mxu0 0.0
    %2225 = vmatprep.subr.mxu0 0.0
    %2226 = vmatpush1.xpose.msra.mxu0 0.0
    %2227 = vmatprep.subr.mxu0 0.0
    %2228 = vmatpush1.xpose.msra.mxu0 0.0
    %2229 = vmatprep.subr.mxu0 0.0
    %2230 = vmatpush1.xpose.msra.mxu0 0.0
    %2231 = vmatprep.subr.mxu0 0.0
    %2232 = vmatpush1.xpose.msra.mxu0 0.0
    %2233 = vmatprep.subr.mxu0 0.0
    %2234 = vmatpush1.xpose.msra.mxu0 0.0
    %2235 = vmatprep.subr.mxu0 0.0
    %2236 = vmatpush1.xpose.msra.mxu0 0.0
    %2237 = vmatprep.subr.mxu0 0.0
    %2238 = vmatpush1.xpose.msra.mxu0 0.0
    %2239 = vmatprep.subr.mxu0 0.0
    %2240 = vmatpush1.xpose.msra.mxu0 0.0
    %2241 = vmatprep.subr.mxu0 0.0
    %2242 = vmatpush1.xpose.msra.mxu0 0.0
    %2243 = vmatprep.subr.mxu0 0.0
    %2244 = vmatpush1.xpose.msra.mxu0 0.0
    %2245 = vmatprep.subr.mxu0 0.0
    %2246 = vmatpush1.xpose.msra.mxu0 0.0
    %2247 = vmatprep.subr.mxu0 0.0
    %2248 = vmatpush1.xpose.msra.mxu0 0.0
    %2249 = vmatprep.mubr.f32.mxu0 0.0
    %2250 = vmatmul.mubr.f32.gmra.mrb[0].mxu0 %v2132
    %v2251 = vpop.f32.mrb[0].mxu0
    %v2252 = vadd.f32 %v2130, %v2251
    %v2253 = vpop.f32.mrb[0].mxu0
    %2254 = vmatprep.mubr.f32.mxu0 0.0
    %2255 = vmatmul.mubr.f32.gmra.mrb[0].mxu0 %v2135
    %v2256 = vpop.f32.mrb[0].mxu0
    %v2257 = vadd.f32 %v2130, %v2256
    %v2258 = vpop.f32.mrb[0].mxu0
    %2259 = vdwg.mxu0
    %2260 = vst [vmem:[#allocation2] sm:$0xff] %v2252
    %2261 = vst [vmem:[#allocation2 + $0x8] sm:$0xff] %v2257
    // Predicated region
    $region14: #{tpu_custom_call.1} parent=1 // pred_check
      _
    $region15: #{tpu_custom_call.1} parent=1 // pred_check_branch
      %2263 = sbr.rel (0) target = $region17
    $region16: #{tpu_custom_call.1} parent=1 // pred_region
      %s2265 = ssub.s32 256, 256
      %2266 = vsyncadd [#allocation3], %s2265
      %s2267 = sshll.u32 [#allocation2], 4
      %s2268 = int_to_ptr.vmem [resolvable:$true] %s2267
      %2273 = dma.vmem_to_hbm [thread:$0]  %s2268, 256, %s3, [#allocation3], 128, 128, 8
    $region17: #{tpu_custom_call.1} parent=1 // pred_fallthru
      _
    // Predicated region
    $region18: #{tpu_custom_call.1} parent=1 // pred_check
      _
    $region19: #{tpu_custom_call.1} parent=1 // pred_check_branch
      %2275 = sbr.rel (0) target = $region21
    $region20: #{tpu_custom_call.1} parent=1 // pred_region
      %2276 = dma.done [#allocation3], 256
    $region21: #{tpu_custom_call.1} parent=1 // pred_fallthru
      _
    %2277 = vsyncpa [#allocation3], 1

</llo_original>
